<compile_context>
chip_gen: v6e
topology: v6e:2x2x1
jax: 0.10.0
libtpu: 0.0.40
codegen_flags: <defaults>
</compile_context>

<pallas_src>
import functools
import math

import jax
import jax.numpy as jnp
from jax import lax
from jax.experimental import pallas as pl
from jax.experimental.pallas import tpu as pltpu

LN_EPS = 1e-5  # torch.nn.LayerNorm default


def _gelu_exact(x):
    # matches torch.nn.GELU() default (erf-based, not tanh approximation)
    return 0.5 * x * (1.0 + lax.erf(x * (1.0 / math.sqrt(2.0))))


def _layernorm_f32(x, gamma, beta):
    mu = jnp.mean(x, axis=-1, keepdims=True)
    xc = x - mu
    var = jnp.mean(xc * xc, axis=-1, keepdims=True)
    return (xc * lax.rsqrt(var + LN_EPS)) * gamma + beta


def _pick_gb(B, N, target_rows=256):
    """Batches per grid step: largest divisor of B with roughly <= target_rows tokens."""
    gb = max(1, min(B, target_rows // max(N, 1)))
    while B % gb:
        gb -= 1
    return gb


def _pick_th(H, target=512):
    """Hidden tile: largest multiple of 128 that divides H and is <= target; else H."""
    cands = [t for t in range(128, min(H, target) + 1, 128) if H % t == 0]
    return max(cands) if cands else H


# --------------------------------------------------------------------------------------
# Kernel 1: LayerNorm1 + QKV projection  (per batch-group, Wqkv resident)
# --------------------------------------------------------------------------------------
def ln_qkv_kernel(x_ref, g_ref, beta_ref, w_ref, bqkv_ref, o_ref):
    gb, N, D = x_ref.shape
    O = w_ref.shape[1]
    x = x_ref[...].astype(jnp.float32).reshape(gb * N, D)
    xn = _layernorm_f32(x, g_ref[...], beta_ref[...])
    qkv = jnp.dot(xn.astype(w_ref.dtype), w_ref[...],
                  preferred_element_type=jnp.float32) + bqkv_ref[...]
    o_ref[...] = qkv.reshape(gb, N, O).astype(o_ref.dtype)


def ln_qkv(x, gamma, beta, w_qkv, b_qkv, *, gb, vmem_limit):
    B, N, D = x.shape
    O = w_qkv.shape[1]
    return pl.pallas_call(
        ln_qkv_kernel,
        out_shape=jax.ShapeDtypeStruct((B, N, O), jnp.bfloat16),
        grid_spec=pltpu.PrefetchScalarGridSpec(
            num_scalar_prefetch=0,
            grid=(B // gb,),
            in_specs=[
                pl.BlockSpec((gb, N, D), lambda i: (i, 0, 0)),   # x rows
                pl.BlockSpec((1, D), lambda i: (0, 0)),          # gamma1
                pl.BlockSpec((1, D), lambda i: (0, 0)),          # beta1
                pl.BlockSpec((D, O), lambda i: (0, 0)),          # Wqkv (bf16, resident)
                pl.BlockSpec((1, O), lambda i: (0, 0)),          # bqkv
            ],
            out_specs=pl.BlockSpec((gb, N, O), lambda i: (i, 0, 0)),
        ),
        compiler_params=pltpu.CompilerParams(
            dimension_semantics=("parallel",),
            vmem_limit_bytes=vmem_limit,
        ),
    )(x, gamma, beta, w_qkv, b_qkv)


# --------------------------------------------------------------------------------------
# Kernel 2: per-batch attention (all heads inside) + output projection + residual
#           output is a lane-dense token-major (N, D) block -> no post-attention transpose
# --------------------------------------------------------------------------------------
def attn_proj_kernel(qkv_ref, x_ref, w_ref, b_ref, o_ref, *, num_heads, scale):
    _, N, D3 = qkv_ref.shape
    D = D3 // 3
    hd = D // num_heads
    qkv = qkv_ref[0]                                             # (N, 3D) bf16

    head_outs = []
    for h in range(num_heads):                                   # unrolled head loop
        # fold 1/sqrt(hd) into q once (N*hd elems) instead of scaling the (N, N) scores
        q = qkv[:, h * hd:(h + 1) * hd] * scale                  # (N, hd) bf16
        k = qkv[:, D + h * hd:D + (h + 1) * hd]
        v = qkv[:, 2 * D + h * hd:2 * D + (h + 1) * hd]
        s = lax.dot_general(q, k, (((1,), (1,)), ((), ())),
                            preferred_element_type=jnp.float32)  # (N, N) f32
        m = jnp.max(s, axis=-1, keepdims=True)
        p = jnp.exp(s - m)
        p = p * pl.reciprocal(jnp.sum(p, axis=-1, keepdims=True), approx=True)
        head_outs.append(jnp.dot(p.astype(v.dtype), v,
                                 preferred_element_type=jnp.float32))  # (N, hd) f32

    attn = jnp.concatenate(head_outs, axis=-1)                   # (N, D) f32, token-major
    y = jnp.dot(attn.astype(w_ref.dtype), w_ref[...],
                preferred_element_type=jnp.float32)              # output projection
    o_ref[0] = (x_ref[0].astype(jnp.float32) + y + b_ref[...]).astype(o_ref.dtype)


def attn_proj_residual(qkv, x, w_proj, b_proj, *, num_heads, scale, vmem_limit):
    B, N, D = x.shape
    kernel = functools.partial(attn_proj_kernel, num_heads=num_heads, scale=scale)
    return pl.pallas_call(
        kernel,
        out_shape=jax.ShapeDtypeStruct((B, N, D), jnp.float32),
        grid_spec=pltpu.PrefetchScalarGridSpec(
            num_scalar_prefetch=0,
            grid=(B,),
            in_specs=[
                pl.BlockSpec((1, N, 3 * D), lambda b: (b, 0, 0)),  # qkv rows of this batch
                pl.BlockSpec((1, N, D), lambda b: (b, 0, 0)),      # residual x (f32)
                pl.BlockSpec((D, D), lambda b: (0, 0)),            # Wproj (bf16, resident)
                pl.BlockSpec((1, D), lambda b: (0, 0)),            # bproj
            ],
            out_specs=pl.BlockSpec((1, N, D), lambda b: (b, 0, 0)),
        ),
        compiler_params=pltpu.CompilerParams(
            dimension_semantics=("parallel",),
            vmem_limit_bytes=vmem_limit,
        ),
    )(qkv, x, w_proj, b_proj)


# --------------------------------------------------------------------------------------
# Kernel 3: LayerNorm2 + MLP (fc1 -> GELU -> fc2) + residual, H-tiled with f32 accumulator
# --------------------------------------------------------------------------------------
def ln_mlp_kernel(x_ref, g_ref, beta_ref, w1_ref, b1_ref, w2_ref, b2_ref, o_ref,
                  xn_scratch, acc_scratch):
    gb, N, D = x_ref.shape
    R = gb * N
    j = pl.program_id(1)

    @pl.when(j == 0)
    def _init():
        x = x_ref[...].astype(jnp.float32).reshape(R, D)
        xn = _layernorm_f32(x, g_ref[...], beta_ref[...])
        xn_scratch[...] = xn.astype(xn_scratch.dtype)            # bf16, reused across H tiles
        acc_scratch[...] = jnp.zeros_like(acc_scratch)

    h = jnp.dot(xn_scratch[...], w1_ref[...],
                preferred_element_type=jnp.float32) + b1_ref[...]   # (R, th) f32
    h = _gelu_exact(h)
    # dropout(p=0.0) is identity -> skipped
    acc_scratch[...] += jnp.dot(h.astype(w2_ref.dtype), w2_ref[...],
                                preferred_element_type=jnp.float32)

    @pl.when(j == pl.num_programs(1) - 1)
    def _finalize():
        y = (acc_scratch[...] + b2_ref[...]).reshape(gb, N, D)
        o_ref[...] = (x_ref[...].astype(jnp.float32) + y).astype(o_ref.dtype)


def ln_mlp_residual(x, gamma, beta, w1, b1, w2, b2, *, gb, th, vmem_limit):
    B, N, D = x.shape
    H = w1.shape[1]
    R = gb * N
    return pl.pallas_call(
        ln_mlp_kernel,
        out_shape=jax.ShapeDtypeStruct((B, N, D), jnp.float32),
        grid_spec=pltpu.PrefetchScalarGridSpec(
            num_scalar_prefetch=0,
            grid=(B // gb, H // th),
            in_specs=[
                pl.BlockSpec((gb, N, D), lambda i, j: (i, 0, 0)),  # x (LN input + residual)
                pl.BlockSpec((1, D), lambda i, j: (0, 0)),         # gamma2
                pl.BlockSpec((1, D), lambda i, j: (0, 0)),         # beta2
                pl.BlockSpec((D, th), lambda i, j: (0, j)),        # W1 hidden tile (bf16)
                pl.BlockSpec((1, th), lambda i, j: (0, j)),        # b1 hidden tile
                pl.BlockSpec((th, D), lambda i, j: (j, 0)),        # W2 hidden tile (bf16)
                pl.BlockSpec((1, D), lambda i, j: (0, 0)),         # b2
            ],
            out_specs=pl.BlockSpec((gb, N, D), lambda i, j: (i, 0, 0)),
            scratch_shapes=[
                pltpu.VMEM((R, D), jnp.bfloat16),   # LN(x) reused across hidden tiles
                pltpu.VMEM((R, D), jnp.float32),    # fc2 accumulator
            ],
        ),
        compiler_params=pltpu.CompilerParams(
            dimension_semantics=("parallel", "arbitrary"),
            vmem_limit_bytes=vmem_limit,
        ),
    )(x, gamma, beta, w1, b1, w2, b2)


# --------------------------------------------------------------------------------------
# Full transformer block wrapper — no transposes / pads / slices between kernels
# --------------------------------------------------------------------------------------
def transformer_block(x, params, *, num_heads, gb_target_rows=256, th_target=512,
                      vmem_limit_bytes=48 * 1024 * 1024):
    """x: (B, N, D). Linear weights stored (in, out) (transposed vs torch)."""
    B, N, D = x.shape
    hd = D // num_heads
    scale = hd ** (-0.5)

    gb = _pick_gb(B, N, gb_target_rows)
    H = params["w1"].shape[1]
    th = _pick_th(H, th_target)

    f32, bf16 = jnp.float32, jnp.bfloat16
    # bf16 weights for the MXU; biases / LN params stay f32 (f32 accumulation everywhere).
    w_qkv = params["w_qkv"].astype(bf16)
    w_proj = params["w_proj"].astype(bf16)
    w1 = params["w1"].astype(bf16)
    w2 = params["w2"].astype(bf16)
    b_qkv = params["b_qkv"].reshape(1, -1).astype(f32)
    b_proj = params["b_proj"].reshape(1, -1).astype(f32)
    b1 = params["b1"].reshape(1, -1).astype(f32)
    b2 = params["b2"].reshape(1, -1).astype(f32)
    g1 = params["gamma1"].reshape(1, -1).astype(f32)
    be1 = params["beta1"].reshape(1, -1).astype(f32)
    g2 = params["gamma2"].reshape(1, -1).astype(f32)
    be2 = params["beta2"].reshape(1, -1).astype(f32)

    x_f32 = x.astype(f32)

    # ---- attention branch: x + proj(attn(LN1(x))) ----
    qkv = ln_qkv(x_f32, g1, be1, w_qkv, b_qkv, gb=gb,
                 vmem_limit=vmem_limit_bytes)                              # (B, N, 3D) bf16
    x1 = attn_proj_residual(qkv, x_f32, w_proj, b_proj, num_heads=num_heads,
                            scale=scale, vmem_limit=vmem_limit_bytes)      # (B, N, D) f32

    # ---- MLP branch: x + fc2(GELU(fc1(LN2(x)))) ----
    y = ln_mlp_residual(x1, g2, be2, w1, b1, w2, b2, gb=gb, th=th,
                        vmem_limit=vmem_limit_bytes)                       # (B, N, D) f32

    return y.astype(x.dtype)


# --------------------------------------------------------------------------------------
# Pure-JAX f32 reference (mirrors the PyTorch forward)
# --------------------------------------------------------------------------------------
def reference_transformer_block(x, params, *, num_heads):
    B, N, D = x.shape
    hd = D // num_heads
    scale = hd ** (-0.5)

    def ln(t, g, b):
        mu = jnp.mean(t, axis=-1, keepdims=True)
        var = jnp.mean((t - mu) ** 2, axis=-1, keepdims=True)
        return (t - mu) / jnp.sqrt(var + LN_EPS) * g + b

    h = ln(x, params["gamma1"], params["beta1"])
    qkv = h @ params["w_qkv"] + params["b_qkv"]
    qkv = qkv.reshape(B, N, 3, num_heads, hd).transpose(2, 0, 3, 1, 4)
    q, k, v = qkv[0], qkv[1], qkv[2]
    attn = jnp.einsum("bhnd,bhmd->bhnm", q, k) * scale
    attn = jax.nn.softmax(attn, axis=-1)
    o = jnp.einsum("bhnm,bhmd->bhnd", attn, v)
    o = o.transpose(0, 2, 1, 3).reshape(B, N, D)
    x = x + o @ params["w_proj"] + params["b_proj"]
    h = ln(x, params["gamma2"], params["beta2"])
    h = _gelu_exact(h @ params["w1"] + params["b1"])
    return x + h @ params["w2"] + params["b2"]


if __name__ == "__main__":
    # Small ViT-like shapes: batch=2, seq=8, dim=32, heads=8, mlp_ratio=4 -> hidden=128
    B, N, D = 2, 8, 32
    num_heads = 8
    H = int(D * 4.0)

    key = jax.random.PRNGKey(0)
    keys = jax.random.split(key, 9)
    x = jax.random.normal(keys[0], (B, N, D), dtype=jnp.float32)

    def uniform(k, shape, fan_in):
        bound = 1.0 / math.sqrt(fan_in)
        return jax.random.uniform(k, shape, minval=-bound, maxval=bound, dtype=jnp.float32)

    # torch stores Linear weights as (out, in); we keep them (in, out) for row-major matmuls.
    params = {
        "gamma1": jnp.ones((D,), jnp.float32),
        "beta1": jnp.zeros((D,), jnp.float32),
        "w_qkv": uniform(keys[1], (D, 3 * D), D),
        "b_qkv": uniform(keys[2], (3 * D,), D),
        "w_proj": uniform(keys[3], (D, D), D),
        "b_proj": uniform(keys[4], (D,), D),
        "gamma2": jnp.ones((D,), jnp.float32),
        "beta2": jnp.zeros((D,), jnp.float32),
        "w1": uniform(keys[5], (D, H), D),
        "b1": uniform(keys[6], (H,), D),
        "w2": uniform(keys[7], (H, D), H),
        "b2": uniform(keys[8], (D,), H),
    }

    run = jax.jit(functools.partial(transformer_block, num_heads=num_heads))
    out = jax.block_until_ready(run(x, params))

    ref = reference_transformer_block(x, params, num_heads=num_heads)
    assert out.shape == (B, N, D)
    # bf16 matmuls with f32 accumulation vs f32 reference -> loose tolerance.
    max_err = float(jnp.max(jnp.abs(out.astype(jnp.float32) - ref)))
    assert max_err < 1e-1, f"mismatch vs reference: max abs err {max_err}"

    print("KERNEL_OK")
</pallas_src>

<mosaic_0001>
module attributes {stable_mosaic.version = 11 : i64} {
  func.func @ln_qkv_kernel(%arg0: i32, %arg1: memref<2x8x32xf32, #tpu.memory_space<vmem>>, %arg2: memref<1x32xf32, #tpu.memory_space<vmem>>, %arg3: memref<1x32xf32, #tpu.memory_space<vmem>>, %arg4: memref<32x96xbf16, #tpu.memory_space<vmem>>, %arg5: memref<1x96xf32, #tpu.memory_space<vmem>>, %arg6: memref<2x8x96xbf16, #tpu.memory_space<vmem>>) attributes {dimension_semantics = [#tpu.dimension_semantics<parallel>], iteration_bounds = array<i64: 1>, scalar_prefetch = 0 : i64, scratch_operands = 0 : i64, tpu.core_type = #tpu.core_type<tc>, window_params = [{transform_indices = @transform_0, window_bounds = array<i64: 2, 8, 32>}, {pipeline_mode = #tpu.pipeline_mode<synchronous>, transform_indices = @transform_1, window_bounds = array<i64: 1, 32>}, {pipeline_mode = #tpu.pipeline_mode<synchronous>, transform_indices = @transform_2, window_bounds = array<i64: 1, 32>}, {pipeline_mode = #tpu.pipeline_mode<synchronous>, transform_indices = @transform_3, window_bounds = array<i64: 32, 96>}, {pipeline_mode = #tpu.pipeline_mode<synchronous>, transform_indices = @transform_4, window_bounds = array<i64: 1, 96>}, {transform_indices = @transform_5, window_bounds = array<i64: 2, 8, 96>}]} {
    %c0 = arith.constant 0 : index
    %c0_0 = arith.constant 0 : index
    %c0_1 = arith.constant 0 : index
    %0 = vector.load %arg1[%c0, %c0_0, %c0_1] : memref<2x8x32xf32, #tpu.memory_space<vmem>>, vector<2x8x32xf32>
    %1 = vector.shape_cast %0 : vector<2x8x32xf32> to vector<16x32xf32>
    %c0_2 = arith.constant 0 : index
    %c0_3 = arith.constant 0 : index
    %2 = vector.load %arg2[%c0_2, %c0_3] : memref<1x32xf32, #tpu.memory_space<vmem>>, vector<1x32xf32>
    %c0_4 = arith.constant 0 : index
    %c0_5 = arith.constant 0 : index
    %3 = vector.load %arg3[%c0_4, %c0_5] : memref<1x32xf32, #tpu.memory_space<vmem>>, vector<1x32xf32>
    %cst = arith.constant dense<0.000000e+00> : vector<16xf32>
    %4 = vector.multi_reduction <add>, %1, %cst [1] : vector<16x32xf32> to vector<16xf32>
    %5 = vector.shape_cast %4 : vector<16xf32> to vector<16x1xf32>
    %cst_6 = arith.constant 3.200000e+01 : f32
    %6 = vector.broadcast %cst_6 : f32 to vector<16x1xf32>
    %7 = arith.divf %5, %6 : vector<16x1xf32>
    %8 = vector.broadcast %7 : vector<16x1xf32> to vector<16x32xf32>
    %9 = arith.subf %1, %8 : vector<16x32xf32>
    %10 = arith.mulf %9, %9 : vector<16x32xf32>
    %cst_7 = arith.constant dense<0.000000e+00> : vector<16xf32>
    %11 = vector.multi_reduction <add>, %10, %cst_7 [1] : vector<16x32xf32> to vector<16xf32>
    %12 = vector.shape_cast %11 : vector<16xf32> to vector<16x1xf32>
    %cst_8 = arith.constant 3.200000e+01 : f32
    %13 = vector.broadcast %cst_8 : f32 to vector<16x1xf32>
    %14 = arith.divf %12, %13 : vector<16x1xf32>
    %cst_9 = arith.constant 9.99999974E-6 : f32
    %15 = vector.broadcast %cst_9 : f32 to vector<16x1xf32>
    %16 = arith.addf %14, %15 : vector<16x1xf32>
    %17 = math.rsqrt %16 : vector<16x1xf32>
    %18 = vector.broadcast %17 : vector<16x1xf32> to vector<16x32xf32>
    %19 = arith.mulf %9, %18 : vector<16x32xf32>
    %20 = vector.broadcast %2 : vector<1x32xf32> to vector<16x32xf32>
    %21 = arith.mulf %19, %20 : vector<16x32xf32>
    %22 = vector.broadcast %3 : vector<1x32xf32> to vector<16x32xf32>
    %23 = arith.addf %21, %22 : vector<16x32xf32>
    %24 = arith.truncf %23 : vector<16x32xf32> to vector<16x32xbf16>
    %c0_10 = arith.constant 0 : index
    %c0_11 = arith.constant 0 : index
    %25 = vector.load %arg4[%c0_10, %c0_11] : memref<32x96xbf16, #tpu.memory_space<vmem>>, vector<32x96xbf16>
    %cst_12 = arith.constant dense<0.000000e+00> : vector<16x96xf32>
    %26 = tpu.matmul %24, %25, %cst_12 {dimension_numbers = #tpu.dot_dimension_numbers<[1], [0], [0], [1], [0, 0, 1, 1], [], []>} : vector<16x32xbf16>, vector<32x96xbf16>, vector<16x96xf32> -> vector<16x96xf32>
    %c0_13 = arith.constant 0 : index
    %c0_14 = arith.constant 0 : index
    %27 = vector.load %arg5[%c0_13, %c0_14] : memref<1x96xf32, #tpu.memory_space<vmem>>, vector<1x96xf32>
    %28 = vector.broadcast %27 : vector<1x96xf32> to vector<16x96xf32>
    %29 = arith.addf %26, %28 : vector<16x96xf32>
    %30 = vector.shape_cast %29 : vector<16x96xf32> to vector<2x8x96xf32>
    %31 = arith.truncf %30 : vector<2x8x96xf32> to vector<2x8x96xbf16>
    %c0_15 = arith.constant 0 : index
    %c0_16 = arith.constant 0 : index
    %c0_17 = arith.constant 0 : index
    %32 = vector.load %arg6[%c0_15, %c0_16, %c0_17] : memref<2x8x96xbf16, #tpu.memory_space<vmem>>, vector<2x8x96xbf16>
    tpu.vector_store %arg6[%c0_15, %c0_16, %c0_17], %31 {strides = array<i32>} : memref<2x8x96xbf16, #tpu.memory_space<vmem>>, vector<2x8x96xbf16>,
    return
  }
  func.func @transform_0(%arg0: i32) -> (i32, i32, i32) {
    %c0_i32 = arith.constant 0 : i32
    %c0_i32_0 = arith.constant 0 : i32
    %c0_i32_1 = arith.constant 0 : i32
    return %arg0, %c0_i32, %c0_i32_0 : i32, i32, i32
  }
  func.func @transform_1(%arg0: i32) -> (i32, i32) {
    %c0_i32 = arith.constant 0 : i32
    %c0_i32_0 = arith.constant 0 : i32
    %c0_i32_1 = arith.constant 0 : i32
    return %c0_i32, %c0_i32_0 : i32, i32
  }
  func.func @transform_2(%arg0: i32) -> (i32, i32) {
    %c0_i32 = arith.constant 0 : i32
    %c0_i32_0 = arith.constant 0 : i32
    %c0_i32_1 = arith.constant 0 : i32
    return %c0_i32, %c0_i32_0 : i32, i32
  }
  func.func @transform_3(%arg0: i32) -> (i32, i32) {
    %c0_i32 = arith.constant 0 : i32
    %c0_i32_0 = arith.constant 0 : i32
    %c0_i32_1 = arith.constant 0 : i32
    return %c0_i32, %c0_i32_0 : i32, i32
  }
  func.func @transform_4(%arg0: i32) -> (i32, i32) {
    %c0_i32 = arith.constant 0 : i32
    %c0_i32_0 = arith.constant 0 : i32
    %c0_i32_1 = arith.constant 0 : i32
    return %c0_i32, %c0_i32_0 : i32, i32
  }
  func.func @transform_5(%arg0: i32) -> (i32, i32, i32) {
    %c0_i32 = arith.constant 0 : i32
    %c0_i32_0 = arith.constant 0 : i32
    %c0_i32_1 = arith.constant 0 : i32
    return %arg0, %c0_i32, %c0_i32_0 : i32, i32, i32
  }
}

module attributes {stable_mosaic.version = 11 : i64} {
  func.func @ln_mlp_kernel(%arg0: i32, %arg1: i32, %arg2: memref<2x8x32xf32, #tpu.memory_space<vmem>>, %arg3: memref<1x32xf32, #tpu.memory_space<vmem>>, %arg4: memref<1x32xf32, #tpu.memory_space<vmem>>, %arg5: memref<32x128xbf16, #tpu.memory_space<vmem>>, %arg6: memref<1x128xf32, #tpu.memory_space<vmem>>, %arg7: memref<128x32xbf16, #tpu.memory_space<vmem>>, %arg8: memref<1x32xf32, #tpu.memory_space<vmem>>, %arg9: memref<2x8x32xf32, #tpu.memory_space<vmem>>, %arg10: memref<16x32xbf16, #tpu.memory_space<vmem>>, %arg11: memref<16x32xf32, #tpu.memory_space<vmem>>) attributes {dimension_semantics = [#tpu.dimension_semantics<parallel>, #tpu.dimension_semantics<arbitrary>], iteration_bounds = array<i64: 1, 1>, scalar_prefetch = 0 : i64, scratch_operands = 2 : i64, tpu.core_type = #tpu.core_type<tc>, window_params = [{transform_indices = @transform_0, window_bounds = array<i64: 2, 8, 32>}, {pipeline_mode = #tpu.pipeline_mode<synchronous>, transform_indices = @transform_1, window_bounds = array<i64: 1, 32>}, {pipeline_mode = #tpu.pipeline_mode<synchronous>, transform_indices = @transform_2, window_bounds = array<i64: 1, 32>}, {transform_indices = @transform_3, window_bounds = array<i64: 32, 128>}, {transform_indices = @transform_4, window_bounds = array<i64: 1, 128>}, {transform_indices = @transform_5, window_bounds = array<i64: 128, 32>}, {pipeline_mode = #tpu.pipeline_mode<synchronous>, transform_indices = @transform_6, window_bounds = array<i64: 1, 32>}, {transform_indices = @transform_7, window_bounds = array<i64: 2, 8, 32>}]} {
    %c0_i32 = arith.constant 0 : i32
    %0 = arith.cmpi eq, %arg1, %c0_i32 : i32
    %1 = arith.extui %0 : i1 to i32
    %c0_i32_0 = arith.constant 0 : i32
    %2 = arith.cmpi ne, %1, %c0_i32_0 : i32
    scf.if %2 {
      %c0_18 = arith.constant 0 : index
      %c0_19 = arith.constant 0 : index
      %c0_20 = arith.constant 0 : index
      %26 = vector.load %arg2[%c0_18, %c0_19, %c0_20] : memref<2x8x32xf32, #tpu.memory_space<vmem>>, vector<2x8x32xf32>
      %27 = vector.shape_cast %26 : vector<2x8x32xf32> to vector<16x32xf32>
      %c0_21 = arith.constant 0 : index
      %c0_22 = arith.constant 0 : index
      %28 = vector.load %arg3[%c0_21, %c0_22] : memref<1x32xf32, #tpu.memory_space<vmem>>, vector<1x32xf32>
      %c0_23 = arith.constant 0 : index
      %c0_24 = arith.constant 0 : index
      %29 = vector.load %arg4[%c0_23, %c0_24] : memref<1x32xf32, #tpu.memory_space<vmem>>, vector<1x32xf32>
      %cst_25 = arith.constant dense<0.000000e+00> : vector<16xf32>
      %30 = vector.multi_reduction <add>, %27, %cst_25 [1] : vector<16x32xf32> to vector<16xf32>
      %31 = vector.shape_cast %30 : vector<16xf32> to vector<16x1xf32>
      %cst_26 = arith.constant 3.200000e+01 : f32
      %32 = vector.broadcast %cst_26 : f32 to vector<16x1xf32>
      %33 = arith.divf %31, %32 : vector<16x1xf32>
      %34 = vector.broadcast %33 : vector<16x1xf32> to vector<16x32xf32>
      %35 = arith.subf %27, %34 : vector<16x32xf32>
      %36 = arith.mulf %35, %35 : vector<16x32xf32>
      %cst_27 = arith.constant dense<0.000000e+00> : vector<16xf32>
      %37 = vector.multi_reduction <add>, %36, %cst_27 [1] : vector<16x32xf32> to vector<16xf32>
      %38 = vector.shape_cast %37 : vector<16xf32> to vector<16x1xf32>
      %cst_28 = arith.constant 3.200000e+01 : f32
      %39 = vector.broadcast %cst_28 : f32 to vector<16x1xf32>
      %40 = arith.divf %38, %39 : vector<16x1xf32>
      %cst_29 = arith.constant 9.99999974E-6 : f32
      %41 = vector.broadcast %cst_29 : f32 to vector<16x1xf32>
      %42 = arith.addf %40, %41 : vector<16x1xf32>
      %43 = math.rsqrt %42 : vector<16x1xf32>
      %44 = vector.broadcast %43 : vector<16x1xf32> to vector<16x32xf32>
      %45 = arith.mulf %35, %44 : vector<16x32xf32>
      %46 = vector.broadcast %28 : vector<1x32xf32> to vector<16x32xf32>
      %47 = arith.mulf %45, %46 : vector<16x32xf32>
      %48 = vector.broadcast %29 : vector<1x32xf32> to vector<16x32xf32>
      %49 = arith.addf %47, %48 : vector<16x32xf32>
      %50 = arith.truncf %49 : vector<16x32xf32> to vector<16x32xbf16>
      %c0_30 = arith.constant 0 : index
      %c0_31 = arith.constant 0 : index
      %51 = vector.load %arg10[%c0_30, %c0_31] : memref<16x32xbf16, #tpu.memory_space<vmem>>, vector<16x32xbf16>
      tpu.vector_store %arg10[%c0_30, %c0_31], %50 {strides = array<i32>} : memref<16x32xbf16, #tpu.memory_space<vmem>>, vector<16x32xbf16>,
      %cst_32 = arith.constant 0.000000e+00 : f32
      %52 = vector.broadcast %cst_32 : f32 to vector<16x32xf32>
      %c0_33 = arith.constant 0 : index
      %c0_34 = arith.constant 0 : index
      %53 = vector.load %arg11[%c0_33, %c0_34] : memref<16x32xf32, #tpu.memory_space<vmem>>, vector<16x32xf32>
      tpu.vector_store %arg11[%c0_33, %c0_34], %52 {strides = array<i32>} : memref<16x32xf32, #tpu.memory_space<vmem>>, vector<16x32xf32>,
    } else {
    }
    %c0 = arith.constant 0 : index
    %c0_1 = arith.constant 0 : index
    %3 = vector.load %arg10[%c0, %c0_1] : memref<16x32xbf16, #tpu.memory_space<vmem>>, vector<16x32xbf16>
    %c0_2 = arith.constant 0 : index
    %c0_3 = arith.constant 0 : index
    %4 = vector.load %arg5[%c0_2, %c0_3] : memref<32x128xbf16, #tpu.memory_space<vmem>>, vector<32x128xbf16>
    %cst = arith.constant dense<0.000000e+00> : vector<16x128xf32>
    %5 = tpu.matmul %3, %4, %cst {dimension_numbers = #tpu.dot_dimension_numbers<[1], [0], [0], [1], [0, 0, 1, 1], [], []>} : vector<16x32xbf16>, vector<32x128xbf16>, vector<16x128xf32> -> vector<16x128xf32>
    %c0_4 = arith.constant 0 : index
    %c0_5 = arith.constant 0 : index
    %6 = vector.load %arg6[%c0_4, %c0_5] : memref<1x128xf32, #tpu.memory_space<vmem>>, vector<1x128xf32>
    %7 = vector.broadcast %6 : vector<1x128xf32> to vector<16x128xf32>
    %8 = arith.addf %5, %7 : vector<16x128xf32>
    %cst_6 = arith.constant 5.000000e-01 : f32
    %9 = vector.broadcast %cst_6 : f32 to vector<16x128xf32>
    %10 = arith.mulf %9, %8 : vector<16x128xf32>
    %cst_7 = arith.constant 0.707106769 : f32
    %11 = vector.broadcast %cst_7 : f32 to vector<16x128xf32>
    %12 = arith.mulf %8, %11 : vector<16x128xf32>
    %13 = math.erf %12 : vector<16x128xf32>
    %cst_8 = arith.constant 1.000000e+00 : f32
    %14 = vector.broadcast %cst_8 : f32 to vector<16x128xf32>
    %15 = arith.addf %14, %13 : vector<16x128xf32>
    %16 = arith.mulf %10, %15 : vector<16x128xf32>
    %c0_9 = arith.constant 0 : index
    %c0_10 = arith.constant 0 : index
    %17 = vector.load %arg11[%c0_9, %c0_10] : memref<16x32xf32, #tpu.memory_space<vmem>>, vector<16x32xf32>
    %18 = arith.truncf %16 : vector<16x128xf32> to vector<16x128xbf16>
    %c0_11 = arith.constant 0 : index
    %c0_12 = arith.constant 0 : index
    %19 = vector.load %arg7[%c0_11, %c0_12] : memref<128x32xbf16, #tpu.memory_space<vmem>>, vector<128x32xbf16>
    %cst_13 = arith.constant dense<0.000000e+00> : vector<16x32xf32>
    %20 = tpu.matmul %18, %19, %cst_13 {dimension_numbers = #tpu.dot_dimension_numbers<[1], [0], [0], [1], [0, 0, 1, 1], [], []>} : vector<16x128xbf16>, vector<128x32xbf16>, vector<16x32xf32> -> vector<16x32xf32>
    %21 = arith.addf %17, %20 : vector<16x32xf32>
    %c0_14 = arith.constant 0 : index
    %c0_15 = arith.constant 0 : index
    %22 = vector.load %arg11[%c0_14, %c0_15] : memref<16x32xf32, #tpu.memory_space<vmem>>, vector<16x32xf32>
    tpu.vector_store %arg11[%c0_14, %c0_15], %21 {strides = array<i32>} : memref<16x32xf32, #tpu.memory_space<vmem>>, vector<16x32xf32>,
    %c0_i32_16 = arith.constant 0 : i32
    %23 = arith.cmpi eq, %arg1, %c0_i32_16 : i32
    %24 = arith.extui %23 : i1 to i32
    %c0_i32_17 = arith.constant 0 : i32
    %25 = arith.cmpi ne, %24, %c0_i32_17 : i32
    scf.if %25 {
      %c0_18 = arith.constant 0 : index
      %c0_19 = arith.constant 0 : index
      %26 = vector.load %arg11[%c0_18, %c0_19] : memref<16x32xf32, #tpu.memory_space<vmem>>, vector<16x32xf32>
      %c0_20 = arith.constant 0 : index
      %c0_21 = arith.constant 0 : index
      %27 = vector.load %arg8[%c0_20, %c0_21] : memref<1x32xf32, #tpu.memory_space<vmem>>, vector<1x32xf32>
      %28 = vector.broadcast %27 : vector<1x32xf32> to vector<16x32xf32>
      %29 = arith.addf %26, %28 : vector<16x32xf32>
      %30 = vector.shape_cast %29 : vector<16x32xf32> to vector<2x8x32xf32>
      %c0_22 = arith.constant 0 : index
      %c0_23 = arith.constant 0 : index
      %c0_24 = arith.constant 0 : index
      %31 = vector.load %arg2[%c0_22, %c0_23, %c0_24] : memref<2x8x32xf32, #tpu.memory_space<vmem>>, vector<2x8x32xf32>
      %32 = arith.addf %31, %30 : vector<2x8x32xf32>
      %c0_25 = arith.constant 0 : index
      %c0_26 = arith.constant 0 : index
      %c0_27 = arith.constant 0 : index
      %33 = vector.load %arg9[%c0_25, %c0_26, %c0_27] : memref<2x8x32xf32, #tpu.memory_space<vmem>>, vector<2x8x32xf32>
      tpu.vector_store %arg9[%c0_25, %c0_26, %c0_27], %32 {strides = array<i32>} : memref<2x8x32xf32, #tpu.memory_space<vmem>>, vector<2x8x32xf32>,
    } else {
    }
    return
  }
  func.func @transform_0(%arg0: i32, %arg1: i32) -> (i32, i32, i32) {
    %c0_i32 = arith.constant 0 : i32
    %c0_i32_0 = arith.constant 0 : i32
    %c0_i32_1 = arith.constant 0 : i32
    return %arg0, %c0_i32, %c0_i32_0 : i32, i32, i32
  }
  func.func @transform_1(%arg0: i32, %arg1: i32) -> (i32, i32) {
    %c0_i32 = arith.constant 0 : i32
    %c0_i32_0 = arith.constant 0 : i32
    %c0_i32_1 = arith.constant 0 : i32
    return %c0_i32, %c0_i32_0 : i32, i32
  }
  func.func @transform_2(%arg0: i32, %arg1: i32) -> (i32, i32) {
    %c0_i32 = arith.constant 0 : i32
    %c0_i32_0 = arith.constant 0 : i32
    %c0_i32_1 = arith.constant 0 : i32
    return %c0_i32, %c0_i32_0 : i32, i32
  }
  func.func @transform_3(%arg0: i32, %arg1: i32) -> (i32, i32) {
    %c0_i32 = arith.constant 0 : i32
    %c0_i32_0 = arith.constant 0 : i32
    return %c0_i32, %arg1 : i32, i32
  }
  func.func @transform_4(%arg0: i32, %arg1: i32) -> (i32, i32) {
    %c0_i32 = arith.constant 0 : i32
    %c0_i32_0 = arith.constant 0 : i32
    return %c0_i32, %arg1 : i32, i32
  }
  func.func @transform_5(%arg0: i32, %arg1: i32) -> (i32, i32) {
    %c0_i32 = arith.constant 0 : i32
    %c0_i32_0 = arith.constant 0 : i32
    return %arg1, %c0_i32 : i32, i32
  }
  func.func @transform_6(%arg0: i32, %arg1: i32) -> (i32, i32) {
    %c0_i32 = arith.constant 0 : i32
    %c0_i32_0 = arith.constant 0 : i32
    %c0_i32_1 = arith.constant 0 : i32
    return %c0_i32, %c0_i32_0 : i32, i32
  }
  func.func @transform_7(%arg0: i32, %arg1: i32) -> (i32, i32, i32) {
    %c0_i32 = arith.constant 0 : i32
    %c0_i32_0 = arith.constant 0 : i32
    %c0_i32_1 = arith.constant 0 : i32
    return %arg0, %c0_i32, %c0_i32_0 : i32, i32, i32
  }
}

module attributes {stable_mosaic.version = 11 : i64} {
  func.func @attn_proj_kernel(%arg0: i32, %arg1: memref<1x8x96xbf16, #tpu.memory_space<vmem>>, %arg2: memref<1x8x32xf32, #tpu.memory_space<vmem>>, %arg3: memref<32x32xbf16, #tpu.memory_space<vmem>>, %arg4: memref<1x32xf32, #tpu.memory_space<vmem>>, %arg5: memref<1x8x32xf32, #tpu.memory_space<vmem>>) attributes {dimension_semantics = [#tpu.dimension_semantics<parallel>], iteration_bounds = array<i64: 2>, scalar_prefetch = 0 : i64, scratch_operands = 0 : i64, tpu.core_type = #tpu.core_type<tc>, window_params = [{transform_indices = @transform_0, window_bounds = array<i64: 1, 8, 96>}, {transform_indices = @transform_1, window_bounds = array<i64: 1, 8, 32>}, {pipeline_mode = #tpu.pipeline_mode<synchronous>, transform_indices = @transform_2, window_bounds = array<i64: 32, 32>}, {pipeline_mode = #tpu.pipeline_mode<synchronous>, transform_indices = @transform_3, window_bounds = array<i64: 1, 32>}, {transform_indices = @transform_4, window_bounds = array<i64: 1, 8, 32>}]} {
    %c0 = arith.constant 0 : index
    %c0_0 = arith.constant 0 : index
    %c0_1 = arith.constant 0 : index
    %0 = vector.load %arg1[%c0, %c0_0, %c0_1] : memref<1x8x96xbf16, #tpu.memory_space<vmem>>, vector<1x8x96xbf16>
    %1 = vector.shape_cast %0 : vector<1x8x96xbf16> to vector<8x96xbf16>
    %2 = vector.extract_strided_slice %1 {offsets = [0, 0], sizes = [8, 4], strides = [1, 1]} : vector<8x96xbf16> to vector<8x4xbf16>
    %cst = arith.constant 5.000000e-01 : bf16
    %3 = vector.broadcast %cst : bf16 to vector<8x4xbf16>
    %4 = arith.mulf %2, %3 : vector<8x4xbf16>
    %5 = vector.extract_strided_slice %1 {offsets = [0, 32], sizes = [8, 4], strides = [1, 1]} : vector<8x96xbf16> to vector<8x4xbf16>
    %6 = vector.extract_strided_slice %1 {offsets = [0, 64], sizes = [8, 4], strides = [1, 1]} : vector<8x96xbf16> to vector<8x4xbf16>
    %cst_2 = arith.constant dense<0.000000e+00> : vector<8x8xf32>
    %7 = tpu.matmul %4, %5, %cst_2 {dimension_numbers = #tpu.dot_dimension_numbers<[1], [1], [0], [0], [0, 0, 1, 0], [], []>} : vector<8x4xbf16>, vector<8x4xbf16>, vector<8x8xf32> -> vector<8x8xf32>
    %cst_3 = arith.constant dense<0xFF800000> : vector<8xf32>
    %8 = vector.multi_reduction <maximumf>, %7, %cst_3 [1] : vector<8x8xf32> to vector<8xf32>
    %9 = vector.shape_cast %8 : vector<8xf32> to vector<8x1xf32>
    %10 = vector.broadcast %9 : vector<8x1xf32> to vector<8x8xf32>
    %11 = arith.subf %7, %10 : vector<8x8xf32>
    %12 = math.exp %11 : vector<8x8xf32>
    %cst_4 = arith.constant dense<0.000000e+00> : vector<8xf32>
    %13 = vector.multi_reduction <add>, %12, %cst_4 [1] : vector<8x8xf32> to vector<8xf32>
    %14 = vector.shape_cast %13 : vector<8xf32> to vector<8x1xf32>
    %15 = tpu.reciprocal %14 {approx = true} : vector<8x1xf32> -> vector<8x1xf32>
    %16 = vector.broadcast %15 : vector<8x1xf32> to vector<8x8xf32>
    %17 = arith.mulf %12, %16 : vector<8x8xf32>
    %18 = arith.truncf %17 : vector<8x8xf32> to vector<8x8xbf16>
    %cst_5 = arith.constant dense<0.000000e+00> : vector<8x4xf32>
    %19 = tpu.matmul %18, %6, %cst_5 {dimension_numbers = #tpu.dot_dimension_numbers<[1], [0], [0], [1], [0, 0, 1, 1], [], []>} : vector<8x8xbf16>, vector<8x4xbf16>, vector<8x4xf32> -> vector<8x4xf32>
    %20 = vector.extract_strided_slice %1 {offsets = [0, 4], sizes = [8, 4], strides = [1, 1]} : vector<8x96xbf16> to vector<8x4xbf16>
    %cst_6 = arith.constant 5.000000e-01 : bf16
    %21 = vector.broadcast %cst_6 : bf16 to vector<8x4xbf16>
    %22 = arith.mulf %20, %21 : vector<8x4xbf16>
    %23 = vector.extract_strided_slice %1 {offsets = [0, 36], sizes = [8, 4], strides = [1, 1]} : vector<8x96xbf16> to vector<8x4xbf16>
    %24 = vector.extract_strided_slice %1 {offsets = [0, 68], sizes = [8, 4], strides = [1, 1]} : vector<8x96xbf16> to vector<8x4xbf16>
    %cst_7 = arith.constant dense<0.000000e+00> : vector<8x8xf32>
    %25 = tpu.matmul %22, %23, %cst_7 {dimension_numbers = #tpu.dot_dimension_numbers<[1], [1], [0], [0], [0, 0, 1, 0], [], []>} : vector<8x4xbf16>, vector<8x4xbf16>, vector<8x8xf32> -> vector<8x8xf32>
    %cst_8 = arith.constant dense<0xFF800000> : vector<8xf32>
    %26 = vector.multi_reduction <maximumf>, %25, %cst_8 [1] : vector<8x8xf32> to vector<8xf32>
    %27 = vector.shape_cast %26 : vector<8xf32> to vector<8x1xf32>
    %28 = vector.broadcast %27 : vector<8x1xf32> to vector<8x8xf32>
    %29 = arith.subf %25, %28 : vector<8x8xf32>
    %30 = math.exp %29 : vector<8x8xf32>
    %cst_9 = arith.constant dense<0.000000e+00> : vector<8xf32>
    %31 = vector.multi_reduction <add>, %30, %cst_9 [1] : vector<8x8xf32> to vector<8xf32>
    %32 = vector.shape_cast %31 : vector<8xf32> to vector<8x1xf32>
    %33 = tpu.reciprocal %32 {approx = true} : vector<8x1xf32> -> vector<8x1xf32>
    %34 = vector.broadcast %33 : vector<8x1xf32> to vector<8x8xf32>
    %35 = arith.mulf %30, %34 : vector<8x8xf32>
    %36 = arith.truncf %35 : vector<8x8xf32> to vector<8x8xbf16>
    %cst_10 = arith.constant dense<0.000000e+00> : vector<8x4xf32>
    %37 = tpu.matmul %36, %24, %cst_10 {dimension_numbers = #tpu.dot_dimension_numbers<[1], [0], [0], [1], [0, 0, 1, 1], [], []>} : vector<8x8xbf16>, vector<8x4xbf16>, vector<8x4xf32> -> vector<8x4xf32>
    %38 = vector.extract_strided_slice %1 {offsets = [0, 8], sizes = [8, 4], strides = [1, 1]} : vector<8x96xbf16> to vector<8x4xbf16>
    %cst_11 = arith.constant 5.000000e-01 : bf16
    %39 = vector.broadcast %cst_11 : bf16 to vector<8x4xbf16>
    %40 = arith.mulf %38, %39 : vector<8x4xbf16>
    %41 = vector.extract_strided_slice %1 {offsets = [0, 40], sizes = [8, 4], strides = [1, 1]} : vector<8x96xbf16> to vector<8x4xbf16>
    %42 = vector.extract_strided_slice %1 {offsets = [0, 72], sizes = [8, 4], strides = [1, 1]} : vector<8x96xbf16> to vector<8x4xbf16>
    %cst_12 = arith.constant dense<0.000000e+00> : vector<8x8xf32>
    %43 = tpu.matmul %40, %41, %cst_12 {dimension_numbers = #tpu.dot_dimension_numbers<[1], [1], [0], [0], [0, 0, 1, 0], [], []>} : vector<8x4xbf16>, vector<8x4xbf16>, vector<8x8xf32> -> vector<8x8xf32>
    %cst_13 = arith.constant dense<0xFF800000> : vector<8xf32>
    %44 = vector.multi_reduction <maximumf>, %43, %cst_13 [1] : vector<8x8xf32> to vector<8xf32>
    %45 = vector.shape_cast %44 : vector<8xf32> to vector<8x1xf32>
    %46 = vector.broadcast %45 : vector<8x1xf32> to vector<8x8xf32>
    %47 = arith.subf %43, %46 : vector<8x8xf32>
    %48 = math.exp %47 : vector<8x8xf32>
    %cst_14 = arith.constant dense<0.000000e+00> : vector<8xf32>
    %49 = vector.multi_reduction <add>, %48, %cst_14 [1] : vector<8x8xf32> to vector<8xf32>
    %50 = vector.shape_cast %49 : vector<8xf32> to vector<8x1xf32>
    %51 = tpu.reciprocal %50 {approx = true} : vector<8x1xf32> -> vector<8x1xf32>
    %52 = vector.broadcast %51 : vector<8x1xf32> to vector<8x8xf32>
    %53 = arith.mulf %48, %52 : vector<8x8xf32>
    %54 = arith.truncf %53 : vector<8x8xf32> to vector<8x8xbf16>
    %cst_15 = arith.constant dense<0.000000e+00> : vector<8x4xf32>
    %55 = tpu.matmul %54, %42, %cst_15 {dimension_numbers = #tpu.dot_dimension_numbers<[1], [0], [0], [1], [0, 0, 1, 1], [], []>} : vector<8x8xbf16>, vector<8x4xbf16>, vector<8x4xf32> -> vector<8x4xf32>
    %56 = vector.extract_strided_slice %1 {offsets = [0, 12], sizes = [8, 4], strides = [1, 1]} : vector<8x96xbf16> to vector<8x4xbf16>
    %cst_16 = arith.constant 5.000000e-01 : bf16
    %57 = vector.broadcast %cst_16 : bf16 to vector<8x4xbf16>
    %58 = arith.mulf %56, %57 : vector<8x4xbf16>
    %59 = vector.extract_strided_slice %1 {offsets = [0, 44], sizes = [8, 4], strides = [1, 1]} : vector<8x96xbf16> to vector<8x4xbf16>
    %60 = vector.extract_strided_slice %1 {offsets = [0, 76], sizes = [8, 4], strides = [1, 1]} : vector<8x96xbf16> to vector<8x4xbf16>
    %cst_17 = arith.constant dense<0.000000e+00> : vector<8x8xf32>
    %61 = tpu.matmul %58, %59, %cst_17 {dimension_numbers = #tpu.dot_dimension_numbers<[1], [1], [0], [0], [0, 0, 1, 0], [], []>} : vector<8x4xbf16>, vector<8x4xbf16>, vector<8x8xf32> -> vector<8x8xf32>
    %cst_18 = arith.constant dense<0xFF800000> : vector<8xf32>
    %62 = vector.multi_reduction <maximumf>, %61, %cst_18 [1] : vector<8x8xf32> to vector<8xf32>
    %63 = vector.shape_cast %62 : vector<8xf32> to vector<8x1xf32>
    %64 = vector.broadcast %63 : vector<8x1xf32> to vector<8x8xf32>
    %65 = arith.subf %61, %64 : vector<8x8xf32>
    %66 = math.exp %65 : vector<8x8xf32>
    %cst_19 = arith.constant dense<0.000000e+00> : vector<8xf32>
    %67 = vector.multi_reduction <add>, %66, %cst_19 [1] : vector<8x8xf32> to vector<8xf32>
    %68 = vector.shape_cast %67 : vector<8xf32> to vector<8x1xf32>
    %69 = tpu.reciprocal %68 {approx = true} : vector<8x1xf32> -> vector<8x1xf32>
    %70 = vector.broadcast %69 : vector<8x1xf32> to vector<8x8xf32>
    %71 = arith.mulf %66, %70 : vector<8x8xf32>
    %72 = arith.truncf %71 : vector<8x8xf32> to vector<8x8xbf16>
    %cst_20 = arith.constant dense<0.000000e+00> : vector<8x4xf32>
    %73 = tpu.matmul %72, %60, %cst_20 {dimension_numbers = #tpu.dot_dimension_numbers<[1], [0], [0], [1], [0, 0, 1, 1], [], []>} : vector<8x8xbf16>, vector<8x4xbf16>, vector<8x4xf32> -> vector<8x4xf32>
    %74 = vector.extract_strided_slice %1 {offsets = [0, 16], sizes = [8, 4], strides = [1, 1]} : vector<8x96xbf16> to vector<8x4xbf16>
    %cst_21 = arith.constant 5.000000e-01 : bf16
    %75 = vector.broadcast %cst_21 : bf16 to vector<8x4xbf16>
    %76 = arith.mulf %74, %75 : vector<8x4xbf16>
    %77 = vector.extract_strided_slice %1 {offsets = [0, 48], sizes = [8, 4], strides = [1, 1]} : vector<8x96xbf16> to vector<8x4xbf16>
    %78 = vector.extract_strided_slice %1 {offsets = [0, 80], sizes = [8, 4], strides = [1, 1]} : vector<8x96xbf16> to vector<8x4xbf16>
    %cst_22 = arith.constant dense<0.000000e+00> : vector<8x8xf32>
    %79 = tpu.matmul %76, %77, %cst_22 {dimension_numbers = #tpu.dot_dimension_numbers<[1], [1], [0], [0], [0, 0, 1, 0], [], []>} : vector<8x4xbf16>, vector<8x4xbf16>, vector<8x8xf32> -> vector<8x8xf32>
    %cst_23 = arith.constant dense<0xFF800000> : vector<8xf32>
    %80 = vector.multi_reduction <maximumf>, %79, %cst_23 [1] : vector<8x8xf32> to vector<8xf32>
    %81 = vector.shape_cast %80 : vector<8xf32> to vector<8x1xf32>
    %82 = vector.broadcast %81 : vector<8x1xf32> to vector<8x8xf32>
    %83 = arith.subf %79, %82 : vector<8x8xf32>
    %84 = math.exp %83 : vector<8x8xf32>
    %cst_24 = arith.constant dense<0.000000e+00> : vector<8xf32>
    %85 = vector.multi_reduction <add>, %84, %cst_24 [1] : vector<8x8xf32> to vector<8xf32>
    %86 = vector.shape_cast %85 : vector<8xf32> to vector<8x1xf32>
    %87 = tpu.reciprocal %86 {approx = true} : vector<8x1xf32> -> vector<8x1xf32>
    %88 = vector.broadcast %87 : vector<8x1xf32> to vector<8x8xf32>
    %89 = arith.mulf %84, %88 : vector<8x8xf32>
    %90 = arith.truncf %89 : vector<8x8xf32> to vector<8x8xbf16>
    %cst_25 = arith.constant dense<0.000000e+00> : vector<8x4xf32>
    %91 = tpu.matmul %90, %78, %cst_25 {dimension_numbers = #tpu.dot_dimension_numbers<[1], [0], [0], [1], [0, 0, 1, 1], [], []>} : vector<8x8xbf16>, vector<8x4xbf16>, vector<8x4xf32> -> vector<8x4xf32>
    %92 = vector.extract_strided_slice %1 {offsets = [0, 20], sizes = [8, 4], strides = [1, 1]} : vector<8x96xbf16> to vector<8x4xbf16>
    %cst_26 = arith.constant 5.000000e-01 : bf16
    %93 = vector.broadcast %cst_26 : bf16 to vector<8x4xbf16>
    %94 = arith.mulf %92, %93 : vector<8x4xbf16>
    %95 = vector.extract_strided_slice %1 {offsets = [0, 52], sizes = [8, 4], strides = [1, 1]} : vector<8x96xbf16> to vector<8x4xbf16>
    %96 = vector.extract_strided_slice %1 {offsets = [0, 84], sizes = [8, 4], strides = [1, 1]} : vector<8x96xbf16> to vector<8x4xbf16>
    %cst_27 = arith.constant dense<0.000000e+00> : vector<8x8xf32>
    %97 = tpu.matmul %94, %95, %cst_27 {dimension_numbers = #tpu.dot_dimension_numbers<[1], [1], [0], [0], [0, 0, 1, 0], [], []>} : vector<8x4xbf16>, vector<8x4xbf16>, vector<8x8xf32> -> vector<8x8xf32>
    %cst_28 = arith.constant dense<0xFF800000> : vector<8xf32>
    %98 = vector.multi_reduction <maximumf>, %97, %cst_28 [1] : vector<8x8xf32> to vector<8xf32>
    %99 = vector.shape_cast %98 : vector<8xf32> to vector<8x1xf32>
    %100 = vector.broadcast %99 : vector<8x1xf32> to vector<8x8xf32>
    %101 = arith.subf %97, %100 : vector<8x8xf32>
    %102 = math.exp %101 : vector<8x8xf32>
    %cst_29 = arith.constant dense<0.000000e+00> : vector<8xf32>
    %103 = vector.multi_reduction <add>, %102, %cst_29 [1] : vector<8x8xf32> to vector<8xf32>
    %104 = vector.shape_cast %103 : vector<8xf32> to vector<8x1xf32>
    %105 = tpu.reciprocal %104 {approx = true} : vector<8x1xf32> -> vector<8x1xf32>
    %106 = vector.broadcast %105 : vector<8x1xf32> to vector<8x8xf32>
    %107 = arith.mulf %102, %106 : vector<8x8xf32>
    %108 = arith.truncf %107 : vector<8x8xf32> to vector<8x8xbf16>
    %cst_30 = arith.constant dense<0.000000e+00> : vector<8x4xf32>
    %109 = tpu.matmul %108, %96, %cst_30 {dimension_numbers = #tpu.dot_dimension_numbers<[1], [0], [0], [1], [0, 0, 1, 1], [], []>} : vector<8x8xbf16>, vector<8x4xbf16>, vector<8x4xf32> -> vector<8x4xf32>
    %110 = vector.extract_strided_slice %1 {offsets = [0, 24], sizes = [8, 4], strides = [1, 1]} : vector<8x96xbf16> to vector<8x4xbf16>
    %cst_31 = arith.constant 5.000000e-01 : bf16
    %111 = vector.broadcast %cst_31 : bf16 to vector<8x4xbf16>
    %112 = arith.mulf %110, %111 : vector<8x4xbf16>
    %113 = vector.extract_strided_slice %1 {offsets = [0, 56], sizes = [8, 4], strides = [1, 1]} : vector<8x96xbf16> to vector<8x4xbf16>
    %114 = vector.extract_strided_slice %1 {offsets = [0, 88], sizes = [8, 4], strides = [1, 1]} : vector<8x96xbf16> to vector<8x4xbf16>
    %cst_32 = arith.constant dense<0.000000e+00> : vector<8x8xf32>
    %115 = tpu.matmul %112, %113, %cst_32 {dimension_numbers = #tpu.dot_dimension_numbers<[1], [1], [0], [0], [0, 0, 1, 0], [], []>} : vector<8x4xbf16>, vector<8x4xbf16>, vector<8x8xf32> -> vector<8x8xf32>
    %cst_33 = arith.constant dense<0xFF800000> : vector<8xf32>
    %116 = vector.multi_reduction <maximumf>, %115, %cst_33 [1] : vector<8x8xf32> to vector<8xf32>
    %117 = vector.shape_cast %116 : vector<8xf32> to vector<8x1xf32>
    %118 = vector.broadcast %117 : vector<8x1xf32> to vector<8x8xf32>
    %119 = arith.subf %115, %118 : vector<8x8xf32>
    %120 = math.exp %119 : vector<8x8xf32>
    %cst_34 = arith.constant dense<0.000000e+00> : vector<8xf32>
    %121 = vector.multi_reduction <add>, %120, %cst_34 [1] : vector<8x8xf32> to vector<8xf32>
    %122 = vector.shape_cast %121 : vector<8xf32> to vector<8x1xf32>
    %123 = tpu.reciprocal %122 {approx = true} : vector<8x1xf32> -> vector<8x1xf32>
    %124 = vector.broadcast %123 : vector<8x1xf32> to vector<8x8xf32>
    %125 = arith.mulf %120, %124 : vector<8x8xf32>
    %126 = arith.truncf %125 : vector<8x8xf32> to vector<8x8xbf16>
    %cst_35 = arith.constant dense<0.000000e+00> : vector<8x4xf32>
    %127 = tpu.matmul %126, %114, %cst_35 {dimension_numbers = #tpu.dot_dimension_numbers<[1], [0], [0], [1], [0, 0, 1, 1], [], []>} : vector<8x8xbf16>, vector<8x4xbf16>, vector<8x4xf32> -> vector<8x4xf32>
    %128 = vector.extract_strided_slice %1 {offsets = [0, 28], sizes = [8, 4], strides = [1, 1]} : vector<8x96xbf16> to vector<8x4xbf16>
    %cst_36 = arith.constant 5.000000e-01 : bf16
    %129 = vector.broadcast %cst_36 : bf16 to vector<8x4xbf16>
    %130 = arith.mulf %128, %129 : vector<8x4xbf16>
    %131 = vector.extract_strided_slice %1 {offsets = [0, 60], sizes = [8, 4], strides = [1, 1]} : vector<8x96xbf16> to vector<8x4xbf16>
    %132 = vector.extract_strided_slice %1 {offsets = [0, 92], sizes = [8, 4], strides = [1, 1]} : vector<8x96xbf16> to vector<8x4xbf16>
    %cst_37 = arith.constant dense<0.000000e+00> : vector<8x8xf32>
    %133 = tpu.matmul %130, %131, %cst_37 {dimension_numbers = #tpu.dot_dimension_numbers<[1], [1], [0], [0], [0, 0, 1, 0], [], []>} : vector<8x4xbf16>, vector<8x4xbf16>, vector<8x8xf32> -> vector<8x8xf32>
    %cst_38 = arith.constant dense<0xFF800000> : vector<8xf32>
    %134 = vector.multi_reduction <maximumf>, %133, %cst_38 [1] : vector<8x8xf32> to vector<8xf32>
    %135 = vector.shape_cast %134 : vector<8xf32> to vector<8x1xf32>
    %136 = vector.broadcast %135 : vector<8x1xf32> to vector<8x8xf32>
    %137 = arith.subf %133, %136 : vector<8x8xf32>
    %138 = math.exp %137 : vector<8x8xf32>
    %cst_39 = arith.constant dense<0.000000e+00> : vector<8xf32>
    %139 = vector.multi_reduction <add>, %138, %cst_39 [1] : vector<8x8xf32> to vector<8xf32>
    %140 = vector.shape_cast %139 : vector<8xf32> to vector<8x1xf32>
    %141 = tpu.reciprocal %140 {approx = true} : vector<8x1xf32> -> vector<8x1xf32>
    %142 = vector.broadcast %141 : vector<8x1xf32> to vector<8x8xf32>
    %143 = arith.mulf %138, %142 : vector<8x8xf32>
    %144 = arith.truncf %143 : vector<8x8xf32> to vector<8x8xbf16>
    %cst_40 = arith.constant dense<0.000000e+00> : vector<8x4xf32>
    %145 = tpu.matmul %144, %132, %cst_40 {dimension_numbers = #tpu.dot_dimension_numbers<[1], [0], [0], [1], [0, 0, 1, 1], [], []>} : vector<8x8xbf16>, vector<8x4xbf16>, vector<8x4xf32> -> vector<8x4xf32>
    %146 = tpu.concatenate %19, %37, %55, %73, %91, %109, %127, %145 in 1 : vector<8x4xf32>, vector<8x4xf32>, vector<8x4xf32>, vector<8x4xf32>, vector<8x4xf32>, vector<8x4xf32>, vector<8x4xf32>, vector<8x4xf32> -> vector<8x32xf32>
    %147 = arith.truncf %146 : vector<8x32xf32> to vector<8x32xbf16>
    %c0_41 = arith.constant 0 : index
    %c0_42 = arith.constant 0 : index
    %148 = vector.load %arg3[%c0_41, %c0_42] : memref<32x32xbf16, #tpu.memory_space<vmem>>, vector<32x32xbf16>
    %cst_43 = arith.constant dense<0.000000e+00> : vector<8x32xf32>
    %149 = tpu.matmul %147, %148, %cst_43 {dimension_numbers = #tpu.dot_dimension_numbers<[1], [0], [0], [1], [0, 0, 1, 1], [], []>} : vector<8x32xbf16>, vector<32x32xbf16>, vector<8x32xf32> -> vector<8x32xf32>
    %c0_44 = arith.constant 0 : index
    %c0_45 = arith.constant 0 : index
    %c0_46 = arith.constant 0 : index
    %150 = vector.load %arg2[%c0_44, %c0_45, %c0_46] : memref<1x8x32xf32, #tpu.memory_space<vmem>>, vector<1x8x32xf32>
    %151 = vector.shape_cast %150 : vector<1x8x32xf32> to vector<8x32xf32>
    %152 = arith.addf %151, %149 : vector<8x32xf32>
    %c0_47 = arith.constant 0 : index
    %c0_48 = arith.constant 0 : index
    %153 = vector.load %arg4[%c0_47, %c0_48] : memref<1x32xf32, #tpu.memory_space<vmem>>, vector<1x32xf32>
    %154 = vector.broadcast %153 : vector<1x32xf32> to vector<8x32xf32>
    %155 = arith.addf %152, %154 : vector<8x32xf32>
    %c0_49 = arith.constant 0 : index
    %c0_50 = arith.constant 0 : index
    %c0_51 = arith.constant 0 : index
    %156 = vector.load %arg5[%c0_49, %c0_50, %c0_51] : memref<1x8x32xf32, #tpu.memory_space<vmem>>, vector<1x8x32xf32>
    %157 = vector.shape_cast %156 : vector<1x8x32xf32> to vector<8x32xf32>
    %158 = vector.shape_cast %155 : vector<8x32xf32> to vector<1x8x32xf32>
    tpu.vector_store %arg5[%c0_49, %c0_50, %c0_51], %158 {strides = array<i32>} : memref<1x8x32xf32, #tpu.memory_space<vmem>>, vector<1x8x32xf32>,
    return
  }
  func.func @transform_0(%arg0: i32) -> (i32, i32, i32) {
    %c0_i32 = arith.constant 0 : i32
    %c0_i32_0 = arith.constant 0 : i32
    %c0_i32_1 = arith.constant 0 : i32
    return %arg0, %c0_i32, %c0_i32_0 : i32, i32, i32
  }
  func.func @transform_1(%arg0: i32) -> (i32, i32, i32) {
    %c0_i32 = arith.constant 0 : i32
    %c0_i32_0 = arith.constant 0 : i32
    %c0_i32_1 = arith.constant 0 : i32
    return %arg0, %c0_i32, %c0_i32_0 : i32, i32, i32
  }
  func.func @transform_2(%arg0: i32) -> (i32, i32) {
    %c0_i32 = arith.constant 0 : i32
    %c0_i32_0 = arith.constant 0 : i32
    %c0_i32_1 = arith.constant 0 : i32
    return %c0_i32, %c0_i32_0 : i32, i32
  }
  func.func @transform_3(%arg0: i32) -> (i32, i32) {
    %c0_i32 = arith.constant 0 : i32
    %c0_i32_0 = arith.constant 0 : i32
    %c0_i32_1 = arith.constant 0 : i32
    return %c0_i32, %c0_i32_0 : i32, i32
  }
  func.func @transform_4(%arg0: i32) -> (i32, i32, i32) {
    %c0_i32 = arith.constant 0 : i32
    %c0_i32_0 = arith.constant 0 : i32
    %c0_i32_1 = arith.constant 0 : i32
    return %arg0, %c0_i32, %c0_i32_0 : i32, i32, i32
  }
}

</mosaic_0001>

<llo_original>
// kernel: transformer_block.5
$region0: #{transformer_block.5}
  #allocation0 [shape = 'u32[]', space=smem, size = 0x4, offset = 0x4, fixed_abs, tag = 'smem constant byte address 0x4 - core index']
  #allocation1 [shape = 'u32[144,128]{1,0:T(1,128)}', space=vmem, size = 0x12000, scoped, tag = 'internal scratch']
  #allocation2 [shape = 'bf16[16,32]{1,0:T(8,128)(2,1)}', space=vmem, size = 0x1000, scoped, tag = 'scratch operand']
  #allocation3 [shape = 'f32[16,32]{1,0:T(8,128)}', space=vmem, size = 0x2000, scoped, tag = 'scratch operand']
  %s0 = inlined_call_operand.vmem [shape: f32[2,8,32], index: 0, kind: input, shape index: {}]
  %s1 = inlined_call_operand.vmem [shape: f32[1,32], index: 1, kind: input, shape index: {}]
  %s2 = inlined_call_operand.vmem [shape: f32[1,32], index: 2, kind: input, shape index: {}]
  %s3 = inlined_call_operand.vmem [shape: bf16[32,128], index: 3, kind: input, shape index: {}]
  %s4 = inlined_call_operand.vmem [shape: f32[1,128], index: 4, kind: input, shape index: {}]
  %s5 = inlined_call_operand.vmem [shape: bf16[128,32], index: 5, kind: input, shape index: {}]
  %s6 = inlined_call_operand.vmem [shape: f32[1,32], index: 6, kind: input, shape index: {}]
  %s7 = inlined_call_operand.hbm [shape: f32[2,8,32], index: 7, kind: output, shape index: {}]
  %s8 = sld [smem:[#allocation0]]
  $region46: #{transformer_block.5} parent=0
    _
  %s10 = ssub.s32 1, %s8
  %s11 = scalar_select 0, %s10, %s8
  $region1: #{transformer_block.5} parent=0
    #allocation4 [shape = 'u8[8192]{0}', space=vmem, size = 0x2000, scoped, tag = 'output window, operand 0, single buffered']
    #allocation5 [shape = 's32[1]{0}', space=sflag, size = 0x4, scoped, tag = 'scoped memory for transformer_block.5']
    %12 = vsyncpa [#allocation5], 0
    // Predicated region
    $region2: #{transformer_block.5} parent=1 // pred_check
      _
    $region3: #{transformer_block.5} parent=1 // pred_check_branch
      %14 = sbr.rel (0) target = $region5
    $region4: #{transformer_block.5} parent=1 // pred_region
      _
    $region5: #{transformer_block.5} parent=1 // pred_fallthru
      _
    // Predicated region
    $region6: #{transformer_block.5} parent=1 // pred_check
      _
    $region7: #{transformer_block.5} parent=1 // pred_check_branch
      %16 = sbr.rel (0) target = $region9
    $region8: #{transformer_block.5} parent=1 // pred_region
      _
    $region9: #{transformer_block.5} parent=1 // pred_fallthru
      _
    // Predicated region
    $region10: #{transformer_block.5} parent=1 // pred_check
      _
    $region11: #{transformer_block.5} parent=1 // pred_check_branch
      %18 = sbr.rel (0) target = $region13
    $region12: #{transformer_block.5} parent=1 // pred_region
      _
    $region13: #{transformer_block.5} parent=1 // pred_fallthru
      _
    // Predicated region
    $region14: #{transformer_block.5} parent=1 // pred_check
      _
    $region15: #{transformer_block.5} parent=1 // pred_check_branch
      %20 = sbr.rel (0) target = $region17
    $region16: #{transformer_block.5} parent=1 // pred_region
      _
    $region17: #{transformer_block.5} parent=1 // pred_fallthru
      _
    // Predicated region
    $region18: #{transformer_block.5} parent=1 // pred_check
      _
    $region19: #{transformer_block.5} parent=1 // pred_check_branch
      %22 = sbr.rel (0) target = $region21
    $region20: #{transformer_block.5} parent=1 // pred_region
      _
    $region21: #{transformer_block.5} parent=1 // pred_fallthru
      _
    // Predicated region
    $region22: #{transformer_block.5} parent=1 // pred_check
      _
    $region23: #{transformer_block.5} parent=1 // pred_check_branch
      %24 = sbr.rel (0) target = $region25
    $region24: #{transformer_block.5} parent=1 // pred_region
      _
    $region25: #{transformer_block.5} parent=1 // pred_fallthru
      _
    // Predicated region
    $region26: #{transformer_block.5} parent=1 // pred_check
      _
    $region27: #{transformer_block.5} parent=1 // pred_check_branch
      %26 = sbr.rel (0) target = $region29
    $region28: #{transformer_block.5} parent=1 // pred_region
      _
    $region29: #{transformer_block.5} parent=1 // pred_fallthru
      _
    %p28 = scmp.eq.s32.totalorder 0, 0
    // Predicated region
    $region30: #{transformer_block.5} parent=1 // pred_check
      %p29 = pneg %p28
    $region31: #{transformer_block.5} parent=1 // pred_check_branch
      %31 = sbr.rel (%p29) target = $region33
    $region32: #{transformer_block.5} parent=1 // pred_region
      %v32 = vld [vmem:[%s0] sm:$0xff]
      %v33 = vld [vmem:[%s0 + $0x8] sm:$0xff]
      %v34 = vld [vmem:[%s1] sm:$0x1]
      %v35 = vld [vmem:[%s2] sm:$0x1]
      %vm36 = vcmask 261120
      %v37 = vsel %vm36, %v32, 0.0
      %38 = vadd.xlane.f32.xlu0 %v37
      %v39 = vpop.xlane.xlu0 %38
      %v40 = vsel %vm36, %v33, 0.0
      %41 = vadd.xlane.f32.xlu0 %v40
      %v42 = vpop.xlane.xlu0 %41
      %v43 = vrcp.pop 32.0
      %v44 = vmul.f32 %v39, %v43
      %v45 = vmul.f32 %v42, %v43
      %v46 = vsub.f32 %v32, %v44
      %v47 = vsub.f32 %v33, %v45
      %v48 = vmul.f32 %v46, %v46
      %v49 = vmul.f32 %v47, %v47
      %v50 = vsel %vm36, %v48, 0.0
      %51 = vadd.xlane.f32.xlu0 %v50
      %v52 = vpop.xlane.xlu0 %51
      %v53 = vsel %vm36, %v49, 0.0
      %54 = vadd.xlane.f32.xlu0 %v53
      %v55 = vpop.xlane.xlu0 %54
      %v56 = vmul.f32 %v52, %v43
      %v57 = vmul.f32 %v55, %v43
      %v58 = vadd.f32 %v56, 1e-05
      %v59 = vadd.f32 %v57, 1e-05
      %v60 = vrsqrt.pop %v58
      %v61 = vrsqrt.pop %v59
      %v62 = vmul.f32 %v46, %v60
      %v63 = vmul.f32 %v47, %v61
      %v65 = vlaneseq
      %v66 = vshrl.u32 %v65, 7
      %v67 = vsub.s32 0, %v66
      %v68 = vrot.slane %v34, %v67
      %v70 = vmul.f32 %v62, %v68
      %v71 = vmul.f32 %v63, %v68
      %v73 = vlaneseq
      %v74 = vshrl.u32 %v73, 7
      %v75 = vsub.s32 0, %v74
      %v76 = vrot.slane %v35, %v75
      %v78 = vadd.f32 %v70, %v76
      %v79 = vadd.f32 %v71, %v76
      %v80 = vpack.c.bf16 %v79, %v78
      %v82 = vunpack.c.l.b16 %v80
      %v83 = vunpack.c.h.b16 %v80
      %v84 = vpack.c.b16 %v82, %v82
      %v85 = vpack.c.b16 %v83, %v83
      %vm88 = vcmask 257024
      %89 = vst.msk [vmem:[#allocation2] sm:$0xf] %vm88, %v84
      %90 = vst.msk [vmem:[#allocation2 + $0x4] sm:$0xf] %vm88, %v85
      %91 = vst.msk [vmem:[#allocation3] sm:$0xff] %vm36, 0.0
      %92 = vst.msk [vmem:[#allocation3 + $0x8] sm:$0xff] %vm36, 0.0
    $region33: #{transformer_block.5} parent=1 // pred_fallthru
      _
    %v93 = vld [vmem:[#allocation2] sm:$0xf]
    %v94 = vld [vmem:[#allocation2 + $0x4] sm:$0xf]
    %v95 = vld [vmem:[%s3] sm:$0xf]
    %v96 = vld [vmem:[%s3 + $0x4] sm:$0xf]
    %v97 = vld [vmem:[%s3 + $0x8] sm:$0xf]
    %v98 = vld [vmem:[%s3 + $0xc] sm:$0xf]
    %v99 = vld [vmem:[%s4] sm:$0x1]
    %v101 = vlaneseq
    %v102 = vshrl.u32 %v101, 7
    %v103 = vsub.s32 0, %v102
    %v104 = vrot.slane %v99, %v103
    %v108 = vunpack.c.l.b16 %v93
    %v109 = vunpack.c.l.b16 %v94
    %v110 = vpack.c.b16 %v109, %v108
    %v115 = vunpack.c.l.b16 %v95
    %v116 = vunpack.c.l.b16 %v96
    %v117 = vunpack.c.l.b16 %v97
    %v118 = vunpack.c.l.b16 %v98
    %v119 = vpack.c.b16 %v116, %v115
    %v120 = vpack.c.b16 %v118, %v117
    %vm123 = vcmask 261120
    %v125 = vsel %vm123, %v110, 0
    %127 = vmatprep.subr.bf16.mxu0 0
    %128 = vmatpush1.bf16.msra.mxu0 0
    %129 = vmatprep.subr.bf16.mxu0 0
    %130 = vmatpush1.bf16.msra.mxu0 0
    %131 = vmatprep.subr.bf16.mxu0 0
    %132 = vmatpush1.bf16.msra.mxu0 0
    %133 = vmatprep.subr.bf16.mxu0 0
    %134 = vmatpush1.bf16.msra.mxu0 0
    %135 = vmatprep.subr.bf16.mxu0 0
    %136 = vmatpush1.bf16.msra.mxu0 0
    %137 = vmatprep.subr.bf16.mxu0 0
    %138 = vmatpush1.bf16.msra.mxu0 0
    %139 = vmatprep.subr.bf16.mxu0 0
    %140 = vmatpush1.bf16.msra.mxu0 %v120
    %141 = vmatprep.subr.bf16.mxu0 0
    %142 = vmatpush1.bf16.msra.mxu0 %v119
    %143 = vmatprep.subr.bf16.mxu0 0
    %144 = vmatpush2.bf16.msra.mxu0 0
    %145 = vmatprep.subr.bf16.mxu0 0
    %146 = vmatpush2.bf16.msra.mxu0 0
    %147 = vmatprep.subr.bf16.mxu0 0
    %148 = vmatpush2.bf16.msra.mxu0 0
    %149 = vmatprep.subr.bf16.mxu0 0
    %150 = vmatpush2.bf16.msra.mxu0 0
    %151 = vmatprep.subr.bf16.mxu0 0
    %152 = vmatpush2.bf16.msra.mxu0 0
    %153 = vmatprep.subr.bf16.mxu0 0
    %154 = vmatpush2.bf16.msra.mxu0 0
    %155 = vmatprep.subr.bf16.mxu0 0
    %156 = vmatpush2.bf16.msra.mxu0 0
    %157 = vmatprep.subr.bf16.mxu0 0
    %158 = vmatpush2.bf16.msra.mxu0 0
    %159 = vmatprep.mubr.bf16.mxu0 0
    %160 = vmatmul.mubr.bf16.gmra.mxu0 %v125
    %v161 = vpop.f32.mrf.mxu0
    %v162 = vadd.f32 %v104, %v161
    %v163 = vpop.f32.mrf.mxu0
    %v164 = vpop.f32.mrf.mxu0
    %v165 = vadd.f32 %v104, %v164
    %v166 = vpop.f32.mrf.mxu0
    %167 = vdwg.mxu0
    %v168 = vmul.f32 %v162, 0.5
    %v169 = vmul.f32 %v165, 0.5
    %v170 = vmul.f32 %v162, 0.70710677
    %v171 = vmul.f32 %v165, 0.70710677
    %v172 = verf.f32.pop %v170
    %v173 = verf.f32.pop %v171
    %v174 = vadd.f32 %v172, 1.0
    %v175 = vadd.f32 %v173, 1.0
    %v176 = vmul.f32 %v168, %v174
    %v177 = vmul.f32 %v169, %v175
    %v178 = vld [vmem:[#allocation3] sm:$0xff]
    %v179 = vld [vmem:[#allocation3 + $0x8] sm:$0xff]
    %v180 = vpack.c.bf16 %v177, %v176
    %v181 = vld [vmem:[%s5] sm:$0xf]
    %v182 = vld [vmem:[%s5 + $0x4] sm:$0xf]
    %v183 = vld [vmem:[%s5 + $0x8] sm:$0xf]
    %v184 = vld [vmem:[%s5 + $0xc] sm:$0xf]
    %v185 = vld [vmem:[%s5 + $0x10] sm:$0xf]
    %v186 = vld [vmem:[%s5 + $0x14] sm:$0xf]
    %v187 = vld [vmem:[%s5 + $0x18] sm:$0xf]
    %v188 = vld [vmem:[%s5 + $0x1c] sm:$0xf]
    %v189 = vld [vmem:[%s5 + $0x20] sm:$0xf]
    %v190 = vld [vmem:[%s5 + $0x24] sm:$0xf]
    %v191 = vld [vmem:[%s5 + $0x28] sm:$0xf]
    %v192 = vld [vmem:[%s5 + $0x2c] sm:$0xf]
    %v193 = vld [vmem:[%s5 + $0x30] sm:$0xf]
    %v194 = vld [vmem:[%s5 + $0x34] sm:$0xf]
    %v195 = vld [vmem:[%s5 + $0x38] sm:$0xf]
    %v196 = vld [vmem:[%s5 + $0x3c] sm:$0xf]
    %v213 = vunpack.c.l.b16 %v181
    %v214 = vunpack.c.l.b16 %v182
    %v215 = vunpack.c.l.b16 %v183
    %v216 = vunpack.c.l.b16 %v184
    %v217 = vunpack.c.l.b16 %v185
    %v218 = vunpack.c.l.b16 %v186
    %v219 = vunpack.c.l.b16 %v187
    %v220 = vunpack.c.l.b16 %v188
    %v221 = vunpack.c.l.b16 %v189
    %v222 = vunpack.c.l.b16 %v190
    %v223 = vunpack.c.l.b16 %v191
    %v224 = vunpack.c.l.b16 %v192
    %v225 = vunpack.c.l.b16 %v193
    %v226 = vunpack.c.l.b16 %v194
    %v227 = vunpack.c.l.b16 %v195
    %v228 = vunpack.c.l.b16 %v196
    %v229 = vpack.c.b16 %v214, %v213
    %v230 = vpack.c.b16 %v216, %v215
    %v231 = vpack.c.b16 %v218, %v217
    %v232 = vpack.c.b16 %v220, %v219
    %v233 = vpack.c.b16 %v222, %v221
    %v234 = vpack.c.b16 %v224, %v223
    %v235 = vpack.c.b16 %v226, %v225
    %v236 = vpack.c.b16 %v228, %v227
    %245 = vmatprep.subr.bf16.mxu0 0
    %246 = vmatpush1.bf16.msra.mxu0 %v236
    %247 = vmatprep.subr.bf16.mxu0 0
    %248 = vmatpush1.bf16.msra.mxu0 %v235
    %249 = vmatprep.subr.bf16.mxu0 0
    %250 = vmatpush1.bf16.msra.mxu0 %v234
    %251 = vmatprep.subr.bf16.mxu0 0
    %252 = vmatpush1.bf16.msra.mxu0 %v233
    %253 = vmatprep.subr.bf16.mxu0 0
    %254 = vmatpush1.bf16.msra.mxu0 %v232
    %255 = vmatprep.subr.bf16.mxu0 0
    %256 = vmatpush1.bf16.msra.mxu0 %v231
    %257 = vmatprep.subr.bf16.mxu0 0
    %258 = vmatpush1.bf16.msra.mxu0 %v230
    %259 = vmatprep.subr.bf16.mxu0 0
    %260 = vmatpush1.bf16.msra.mxu0 %v229
    %261 = vmatprep.subr.bf16.mxu0 0
    %262 = vmatpush2.bf16.msra.mxu0 0
    %263 = vmatprep.subr.bf16.mxu0 0
    %264 = vmatpush2.bf16.msra.mxu0 0
    %265 = vmatprep.subr.bf16.mxu0 0
    %266 = vmatpush2.bf16.msra.mxu0 0
    %267 = vmatprep.subr.bf16.mxu0 0
    %268 = vmatpush2.bf16.msra.mxu0 0
    %269 = vmatprep.subr.bf16.mxu0 0
    %270 = vmatpush2.bf16.msra.mxu0 0
    %271 = vmatprep.subr.bf16.mxu0 0
    %272 = vmatpush2.bf16.msra.mxu0 0
    %273 = vmatprep.subr.bf16.mxu0 0
    %274 = vmatpush2.bf16.msra.mxu0 0
    %275 = vmatprep.subr.bf16.mxu0 0
    %276 = vmatpush2.bf16.msra.mxu0 0
    %277 = vmatprep.mubr.bf16.mxu0 0
    %278 = vmatmul.mubr.bf16.gmra.mxu0 %v180
    %v279 = vpop.f32.mrf.mxu0
    %v280 = vadd.f32 0.0, %v279
    %v281 = vpop.f32.mrf.mxu0
    %v282 = vpop.f32.mrf.mxu0
    %v283 = vadd.f32 0.0, %v282
    %v284 = vpop.f32.mrf.mxu0
    %285 = vdwg.mxu0
    %v286 = vadd.f32 %v178, %v280
    %v287 = vadd.f32 %v179, %v283
    %288 = vst.msk [vmem:[#allocation3] sm:$0xff] %vm123, %v286
    %289 = vst.msk [vmem:[#allocation3 + $0x8] sm:$0xff] %vm123, %v287
    // Predicated region
    $region34: #{transformer_block.5} parent=1 // pred_check
      %p290 = pneg %p28
    $region35: #{transformer_block.5} parent=1 // pred_check_branch
      %292 = sbr.rel (%p290) target = $region37
    $region36: #{transformer_block.5} parent=1 // pred_region
      %v293 = vld [vmem:[#allocation3] sm:$0xff]
      %v294 = vld [vmem:[#allocation3 + $0x8] sm:$0xff]
      %v295 = vld [vmem:[%s6] sm:$0x1]
      %v297 = vlaneseq
      %v298 = vshrl.u32 %v297, 7
      %v299 = vsub.s32 0, %v298
      %v300 = vrot.slane %v295, %v299
      %v302 = vadd.f32 %v293, %v300
      %v303 = vadd.f32 %v294, %v300
      %v304 = vld [vmem:[%s0] sm:$0xff]
      %v305 = vld [vmem:[%s0 + $0x8] sm:$0xff]
      %v306 = vadd.f32 %v304, %v302
      %v307 = vadd.f32 %v305, %v303
      %308 = vst.msk [vmem:[#allocation4] sm:$0xff] %vm123, %v306
      %309 = vst.msk [vmem:[#allocation4 + $0x8] sm:$0xff] %vm123, %v307
    $region37: #{transformer_block.5} parent=1 // pred_fallthru
      _
    // Predicated region
    $region38: #{transformer_block.5} parent=1 // pred_check
      _
    $region39: #{transformer_block.5} parent=1 // pred_check_branch
      %311 = sbr.rel (0) target = $region41
    $region40: #{transformer_block.5} parent=1 // pred_region
      %s313 = ssub.s32 256, 256
      %314 = vsyncadd [#allocation5], %s313
      %s315 = sshll.u32 [#allocation4], 4
      %s316 = int_to_ptr.vmem [resolvable:$true] %s315
      %321 = dma.vmem_to_hbm [thread:$0]  %s316, 256, %s7, [#allocation5], 128, 128, 8
    $region41: #{transformer_block.5} parent=1 // pred_fallthru
      _
    // Predicated region
    $region42: #{transformer_block.5} parent=1 // pred_check
      _
    $region43: #{transformer_block.5} parent=1 // pred_check_branch
      %323 = sbr.rel (0) target = $region45
    $region44: #{transformer_block.5} parent=1 // pred_region
      %324 = dma.done [#allocation5], 256
    $region45: #{transformer_block.5} parent=1 // pred_fallthru
      _
    %325 = vsyncpa [#allocation5], 1

// kernel: transformer_block.3
$region0: #{transformer_block.3}
  #allocation0 [shape = 'u32[]', space=smem, size = 0x4, offset = 0x4, fixed_abs, tag = 'smem constant byte address 0x4 - core index']
  #allocation1 [shape = 'u32[144,128]{1,0:T(1,128)}', space=vmem, size = 0x12000, scoped, tag = 'internal scratch']
  %s0 = inlined_call_operand.vmem [shape: f32[2,8,32], index: 0, kind: input, shape index: {}]
  %s1 = inlined_call_operand.vmem [shape: f32[1,32], index: 1, kind: input, shape index: {}]
  %s2 = inlined_call_operand.vmem [shape: f32[1,32], index: 2, kind: input, shape index: {}]
  %s3 = inlined_call_operand.vmem [shape: bf16[32,96], index: 3, kind: input, shape index: {}]
  %s4 = inlined_call_operand.vmem [shape: f32[1,96], index: 4, kind: input, shape index: {}]
  %s5 = inlined_call_operand.vmem [shape: bf16[2,8,96], index: 5, kind: output, shape index: {}]
  %s6 = sld [smem:[#allocation0]]
  $region30: #{transformer_block.3} parent=0
    _
  %s8 = ssub.s32 1, %s6
  %s9 = scalar_select 0, %s8, %s6
  // Predicated region
  $region2: #{transformer_block.3} parent=0 // pred_check
    _
  $region3: #{transformer_block.3} parent=0 // pred_check_branch
    %11 = sbr.rel (0) target = $region5
  $region4: #{transformer_block.3} parent=0 // pred_region
    _
  $region5: #{transformer_block.3} parent=0 // pred_fallthru
    _
  // Predicated region
  $region6: #{transformer_block.3} parent=0 // pred_check
    _
  $region7: #{transformer_block.3} parent=0 // pred_check_branch
    %13 = sbr.rel (0) target = $region9
  $region8: #{transformer_block.3} parent=0 // pred_region
    _
  $region9: #{transformer_block.3} parent=0 // pred_fallthru
    _
  // Predicated region
  $region10: #{transformer_block.3} parent=0 // pred_check
    _
  $region11: #{transformer_block.3} parent=0 // pred_check_branch
    %15 = sbr.rel (0) target = $region13
  $region12: #{transformer_block.3} parent=0 // pred_region
    _
  $region13: #{transformer_block.3} parent=0 // pred_fallthru
    _
  // Predicated region
  $region14: #{transformer_block.3} parent=0 // pred_check
    _
  $region15: #{transformer_block.3} parent=0 // pred_check_branch
    %17 = sbr.rel (0) target = $region17
  $region16: #{transformer_block.3} parent=0 // pred_region
    _
  $region17: #{transformer_block.3} parent=0 // pred_fallthru
    _
  // Predicated region
  $region18: #{transformer_block.3} parent=0 // pred_check
    _
  $region19: #{transformer_block.3} parent=0 // pred_check_branch
    %19 = sbr.rel (0) target = $region21
  $region20: #{transformer_block.3} parent=0 // pred_region
    _
  $region21: #{transformer_block.3} parent=0 // pred_fallthru
    _
  %v21 = vld [vmem:[%s0] sm:$0xff]
  %v22 = vld [vmem:[%s0 + $0x8] sm:$0xff]
  %v23 = vld [vmem:[%s1] sm:$0x1]
  %v24 = vld [vmem:[%s2] sm:$0x1]
  %vm25 = vcmask 261120
  %v26 = vsel %vm25, %v21, 0.0
  %27 = vadd.xlane.f32.xlu0 %v26
  %v28 = vpop.xlane.xlu0 %27
  %v29 = vsel %vm25, %v22, 0.0
  %30 = vadd.xlane.f32.xlu0 %v29
  %v31 = vpop.xlane.xlu0 %30
  %v32 = vrcp.pop 32.0
  %v33 = vmul.f32 %v28, %v32
  %v34 = vmul.f32 %v31, %v32
  %v35 = vsub.f32 %v21, %v33
  %v36 = vsub.f32 %v22, %v34
  %v37 = vmul.f32 %v35, %v35
  %v38 = vmul.f32 %v36, %v36
  %v39 = vsel %vm25, %v37, 0.0
  %40 = vadd.xlane.f32.xlu0 %v39
  %v41 = vpop.xlane.xlu0 %40
  %v42 = vsel %vm25, %v38, 0.0
  %43 = vadd.xlane.f32.xlu0 %v42
  %v44 = vpop.xlane.xlu0 %43
  %v45 = vmul.f32 %v41, %v32
  %v46 = vmul.f32 %v44, %v32
  %v47 = vadd.f32 %v45, 1e-05
  %v48 = vadd.f32 %v46, 1e-05
  %v49 = vrsqrt.pop %v47
  %v50 = vrsqrt.pop %v48
  %v51 = vmul.f32 %v35, %v49
  %v52 = vmul.f32 %v36, %v50
  %v54 = vlaneseq
  %v55 = vshrl.u32 %v54, 7
  %v56 = vsub.s32 0, %v55
  %v57 = vrot.slane %v23, %v56
  %v59 = vmul.f32 %v51, %v57
  %v60 = vmul.f32 %v52, %v57
  %v62 = vlaneseq
  %v63 = vshrl.u32 %v62, 7
  %v64 = vsub.s32 0, %v63
  %v65 = vrot.slane %v24, %v64
  %v67 = vadd.f32 %v59, %v65
  %v68 = vadd.f32 %v60, %v65
  %v69 = vpack.c.bf16 %v68, %v67
  %v70 = vld [vmem:[%s3] sm:$0xf]
  %v71 = vld [vmem:[%s3 + $0x4] sm:$0xf]
  %v72 = vld [vmem:[%s3 + $0x8] sm:$0xf]
  %v73 = vld [vmem:[%s3 + $0xc] sm:$0xf]
  %v74 = vld [vmem:[%s4] sm:$0x1]
  %v76 = vlaneseq
  %v77 = vshrl.u32 %v76, 7
  %v78 = vsub.s32 0, %v77
  %v79 = vrot.slane %v74, %v78
  %v85 = vunpack.c.l.b16 %v70
  %v86 = vunpack.c.l.b16 %v71
  %v87 = vunpack.c.l.b16 %v72
  %v88 = vunpack.c.l.b16 %v73
  %v89 = vpack.c.b16 %v86, %v85
  %v90 = vpack.c.b16 %v88, %v87
  %v94 = vsel %vm25, %v69, 0
  %96 = vmatprep.subr.bf16.mxu0 0
  %97 = vmatpush1.bf16.msra.mxu0 0
  %98 = vmatprep.subr.bf16.mxu0 0
  %99 = vmatpush1.bf16.msra.mxu0 0
  %100 = vmatprep.subr.bf16.mxu0 0
  %101 = vmatpush1.bf16.msra.mxu0 0
  %102 = vmatprep.subr.bf16.mxu0 0
  %103 = vmatpush1.bf16.msra.mxu0 0
  %104 = vmatprep.subr.bf16.mxu0 0
  %105 = vmatpush1.bf16.msra.mxu0 0
  %106 = vmatprep.subr.bf16.mxu0 0
  %107 = vmatpush1.bf16.msra.mxu0 0
  %108 = vmatprep.subr.bf16.mxu0 0
  %109 = vmatpush1.bf16.msra.mxu0 %v90
  %110 = vmatprep.subr.bf16.mxu0 0
  %111 = vmatpush1.bf16.msra.mxu0 %v89
  %112 = vmatprep.subr.bf16.mxu0 0
  %113 = vmatpush2.bf16.msra.mxu0 0
  %114 = vmatprep.subr.bf16.mxu0 0
  %115 = vmatpush2.bf16.msra.mxu0 0
  %116 = vmatprep.subr.bf16.mxu0 0
  %117 = vmatpush2.bf16.msra.mxu0 0
  %118 = vmatprep.subr.bf16.mxu0 0
  %119 = vmatpush2.bf16.msra.mxu0 0
  %120 = vmatprep.subr.bf16.mxu0 0
  %121 = vmatpush2.bf16.msra.mxu0 0
  %122 = vmatprep.subr.bf16.mxu0 0
  %123 = vmatpush2.bf16.msra.mxu0 0
  %124 = vmatprep.subr.bf16.mxu0 0
  %125 = vmatpush2.bf16.msra.mxu0 0
  %126 = vmatprep.subr.bf16.mxu0 0
  %127 = vmatpush2.bf16.msra.mxu0 0
  %128 = vmatprep.mubr.bf16.mxu0 0
  %129 = vmatmul.mubr.bf16.gmra.mxu0 %v94
  %v130 = vpop.f32.mrf.mxu0
  %v131 = vadd.f32 %v79, %v130
  %v132 = vpop.f32.mrf.mxu0
  %v133 = vpop.f32.mrf.mxu0
  %v134 = vadd.f32 %v79, %v133
  %v135 = vpop.f32.mrf.mxu0
  %136 = vdwg.mxu0
  %v137 = vpack.c.bf16 %v131, %v131
  %v138 = vpack.c.bf16 %v134, %v134
  %vm139 = vcmask 781312
  %140 = vst.msk [vmem:[%s5] sm:$0xf] %vm139, %v137
  %141 = vst.msk [vmem:[%s5 + $0x4] sm:$0xf] %vm139, %v138
  // Predicated region
  $region22: #{transformer_block.3} parent=0 // pred_check
    _
  $region23: #{transformer_block.3} parent=0 // pred_check_branch
    %143 = sbr.rel (0) target = $region25
  $region24: #{transformer_block.3} parent=0 // pred_region
    _
  $region25: #{transformer_block.3} parent=0 // pred_fallthru
    _
  // Predicated region
  $region26: #{transformer_block.3} parent=0 // pred_check
    _
  $region27: #{transformer_block.3} parent=0 // pred_check_branch
    %145 = sbr.rel (0) target = $region29
  $region28: #{transformer_block.3} parent=0 // pred_region
    _
  $region29: #{transformer_block.3} parent=0 // pred_fallthru
    _

// kernel: transformer_block.4
$region0: #{transformer_block.4}
  #allocation0 [shape = 'u32[]', space=smem, size = 0x4, offset = 0x4, fixed_abs, tag = 'smem constant byte address 0x4 - core index']
  #allocation1 [shape = 'u32[144,128]{1,0:T(1,128)}', space=vmem, size = 0x12000, scoped, tag = 'internal scratch']
  %s0 = inlined_call_operand.vmem [shape: bf16[2,8,96], index: 0, kind: input, shape index: {}]
  %s1 = inlined_call_operand.vmem [shape: f32[2,8,32], index: 1, kind: input, shape index: {}]
  %s2 = inlined_call_operand.vmem [shape: bf16[32,32], index: 2, kind: input, shape index: {}]
  %s3 = inlined_call_operand.vmem [shape: f32[1,32], index: 3, kind: input, shape index: {}]
  %s4 = inlined_call_operand.vmem [shape: f32[2,8,32], index: 4, kind: output, shape index: {}]
  %s5 = sld [smem:[#allocation0]]
  $region49: #{transformer_block.4} parent=0
    _
  %s7 = ssub.s32 1, %s5
  %s8 = scalar_select 0, %s7, %s5
  loop: start=0, step=1, limit=4
  $region2: #{transformer_block.4} parent=0 // loop_pre_header
    _
  $region3: #{transformer_block.4} parent=0 // loop_header
    %s10 = sphi 0, %s14
    %p11 = scmp.ge.s32.totalorder %s10, 4
    %s20 = sphi 0, %s22
    %s23 = sphi 0, %s20
    %s24 = sphi 0, %s23
    %s40 = sphi 0, %s24
    %s46 = sphi 0, %s48
    %s49 = sphi 0, %s46
    %s50 = sphi 0, %s49
    %s66 = sphi 0, %s50
    %s70 = sphi 0, %s70
    %s72 = sphi 0, %s70
    %s73 = sphi 0, %s72
    %s87 = sphi 0, %s73
    %s91 = sphi 0, %s91
    %s93 = sphi 0, %s91
    %s94 = sphi 0, %s93
    %s108 = sphi 0, %s94
    %s114 = sphi 0, %s116
    %s117 = sphi 0, %s114
    %s118 = sphi 0, %s117
    %s134 = sphi 0, %s118
  $region4: #{transformer_block.4} parent=0 // loop_header_branch
    %13 = sbr.rel (%p11) target = $region8
  $region5: #{transformer_block.4} parent=0 // loop_body
    %s15 = ssub.s32 %s10, 1
    %s16 = ssub.s32 %s10, 2
    %s17 = sadd.s32 %s10, 1
    %s18 = ssub.s32 %s10, %s17
    %p19 = scmp.eq.s32.totalorder %s18, 0
    %s21 = sadd.s32 %s20, 1
    %s22 = scalar_select %p19, %s20, %s21
    %p25 = pneg %p19
    %p26 = scmp.eq.s32.totalorder %s10, 1
    %p27 = por %p25, %p26
    %p28 = scmp.ne.s32.totalorder %s20, %s23
    %p29 = scmp.eq.s32.totalorder %s10, 0
    %p30 = por %p28, %p29
    %p31 = scmp.ne.s32.totalorder %s20, %s23
    %p32 = scmp.eq.s32.totalorder %s15, 1
    %p33 = por %p31, %p32
    %p34 = scmp.ne.s32.totalorder %s23, %s24
    %p35 = scmp.eq.s32.totalorder %s15, 0
    %p36 = por %p34, %p35
    %p37 = scmp.ne.s32.totalorder %s23, %s24
    %p38 = scmp.eq.s32.totalorder %s16, 1
    %p39 = por %p37, %p38
    %p41 = scmp.ne.s32.totalorder %s24, %s40
    %p42 = scmp.eq.s32.totalorder %s16, 0
    %p43 = por %p41, %p42
    %s44 = ssub.s32 %s10, %s17
    %p45 = scmp.eq.s32.totalorder %s44, 0
    %s47 = sadd.s32 %s46, 1
    %s48 = scalar_select %p45, %s46, %s47
    %p51 = pneg %p45
    %p52 = scmp.eq.s32.totalorder %s10, 1
    %p53 = por %p51, %p52
    %p54 = scmp.ne.s32.totalorder %s46, %s49
    %p55 = scmp.eq.s32.totalorder %s10, 0
    %p56 = por %p54, %p55
    %p57 = scmp.ne.s32.totalorder %s46, %s49
    %p58 = scmp.eq.s32.totalorder %s15, 1
    %p59 = por %p57, %p58
    %p60 = scmp.ne.s32.totalorder %s49, %s50
    %p61 = scmp.eq.s32.totalorder %s15, 0
    %p62 = por %p60, %p61
    %p63 = scmp.ne.s32.totalorder %s49, %s50
    %p64 = scmp.eq.s32.totalorder %s16, 1
    %p65 = por %p63, %p64
    %p67 = scmp.ne.s32.totalorder %s50, %s66
    %p68 = scmp.eq.s32.totalorder %s16, 0
    %p69 = por %p67, %p68
    %s71 = sadd.s32 %s70, 1
    %p74 = scmp.eq.s32.totalorder %s10, 1
    %p75 = scmp.ne.s32.totalorder %s70, %s72
    %p76 = scmp.eq.s32.totalorder %s10, 0
    %p77 = por %p75, %p76
    %p78 = scmp.ne.s32.totalorder %s70, %s72
    %p79 = scmp.eq.s32.totalorder %s15, 1
    %p80 = por %p78, %p79
    %p81 = scmp.ne.s32.totalorder %s72, %s73
    %p82 = scmp.eq.s32.totalorder %s15, 0
    %p83 = por %p81, %p82
    %p84 = scmp.ne.s32.totalorder %s72, %s73
    %p85 = scmp.eq.s32.totalorder %s16, 1
    %p86 = por %p84, %p85
    %p88 = scmp.ne.s32.totalorder %s73, %s87
    %p89 = scmp.eq.s32.totalorder %s16, 0
    %p90 = por %p88, %p89
    %s92 = sadd.s32 %s91, 1
    %p95 = scmp.eq.s32.totalorder %s10, 1
    %p96 = scmp.ne.s32.totalorder %s91, %s93
    %p97 = scmp.eq.s32.totalorder %s10, 0
    %p98 = por %p96, %p97
    %p99 = scmp.ne.s32.totalorder %s91, %s93
    %p100 = scmp.eq.s32.totalorder %s15, 1
    %p101 = por %p99, %p100
    %p102 = scmp.ne.s32.totalorder %s93, %s94
    %p103 = scmp.eq.s32.totalorder %s15, 0
    %p104 = por %p102, %p103
    %p105 = scmp.ne.s32.totalorder %s93, %s94
    %p106 = scmp.eq.s32.totalorder %s16, 1
    %p107 = por %p105, %p106
    %p109 = scmp.ne.s32.totalorder %s94, %s108
    %p110 = scmp.eq.s32.totalorder %s16, 0
    %p111 = por %p109, %p110
    %s112 = ssub.s32 %s10, %s17
    %p113 = scmp.eq.s32.totalorder %s112, 0
    %s115 = sadd.s32 %s114, 1
    %s116 = scalar_select %p113, %s114, %s115
    %p119 = pneg %p113
    %p120 = scmp.eq.s32.totalorder %s10, 1
    %p121 = por %p119, %p120
    %p122 = scmp.ne.s32.totalorder %s114, %s117
    %p123 = scmp.eq.s32.totalorder %s10, 0
    %p124 = por %p122, %p123
    %p125 = scmp.ne.s32.totalorder %s114, %s117
    %p126 = scmp.eq.s32.totalorder %s15, 1
    %p127 = por %p125, %p126
    %p128 = scmp.ne.s32.totalorder %s117, %s118
    %p129 = scmp.eq.s32.totalorder %s15, 0
    %p130 = por %p128, %p129
    %p131 = scmp.ne.s32.totalorder %s117, %s118
    %p132 = scmp.eq.s32.totalorder %s16, 1
    %p133 = por %p131, %p132
    %p135 = scmp.ne.s32.totalorder %s118, %s134
    %p136 = scmp.eq.s32.totalorder %s16, 0
    %p137 = por %p135, %p136
    %p138 = scmp.le.s32.totalorder 1, %s10
    %p139 = scmp.lt.s32.totalorder %s10, 3
    %p140 = pnand %p138, %p139
    %p141 = pneg %p140
    // Predicated region
    $region9: #{transformer_block.4} parent=5 // pred_check
      _
    $region10: #{transformer_block.4} parent=5 // pred_check_branch
      %143 = sbr.rel (%p140) target = $region12
    $region11: #{transformer_block.4} parent=5 // pred_region
      %s144 = ssub.s32 %s10, 1
      // Predicated region
      $region13: #{transformer_block.4} parent=11 // pred_check
        %p145 = pneg %p83
      $region14: #{transformer_block.4} parent=11 // pred_check_branch
        %147 = sbr.rel (%p145) target = $region16
      $region15: #{transformer_block.4} parent=11 // pred_region
        _
      $region16: #{transformer_block.4} parent=11 // pred_fallthru
        _
      // Predicated region
      $region17: #{transformer_block.4} parent=11 // pred_check
        %p148 = pneg %p104
      $region18: #{transformer_block.4} parent=11 // pred_check_branch
        %150 = sbr.rel (%p148) target = $region20
      $region19: #{transformer_block.4} parent=11 // pred_region
        _
      $region20: #{transformer_block.4} parent=11 // pred_fallthru
        _
    $region12: #{transformer_block.4} parent=5 // pred_fallthru
      _
    %p151 = scmp.lt.s32.totalorder %s10, 2
    // Predicated region
    $region21: #{transformer_block.4} parent=5 // pred_check
      %p152 = pneg %p151
    $region22: #{transformer_block.4} parent=5 // pred_check_branch
      %154 = sbr.rel (%p152) target = $region24
    $region23: #{transformer_block.4} parent=5 // pred_region
      // Predicated region
      $region25: #{transformer_block.4} parent=23 // pred_check
        %p155 = pneg %p30
      $region26: #{transformer_block.4} parent=23 // pred_check_branch
        %157 = sbr.rel (%p155) target = $region28
      $region27: #{transformer_block.4} parent=23 // pred_region
        %p158 = scmp.lt.s32.totalorder %s10, 1
        %s159 = scalar_select %p158, %s10, 1
        %s160 = smul.addr %s159, 4
        %s161 = scalar_lea.vmem %s0, %s160
      $region28: #{transformer_block.4} parent=23 // pred_fallthru
        _
      // Predicated region
      $region29: #{transformer_block.4} parent=23 // pred_check
        %p162 = pneg %p56
      $region30: #{transformer_block.4} parent=23 // pred_check_branch
        %164 = sbr.rel (%p162) target = $region32
      $region31: #{transformer_block.4} parent=23 // pred_region
        %p165 = scmp.lt.s32.totalorder %s10, 1
        %s166 = scalar_select %p165, %s10, 1
        %s167 = smul.addr %s166, 8
        %s168 = scalar_lea.vmem %s1, %s167
      $region32: #{transformer_block.4} parent=23 // pred_fallthru
        _
    $region24: #{transformer_block.4} parent=5 // pred_fallthru
      _
    %p169 = scmp.le.s32.totalorder 1, %s10
    %p170 = scmp.lt.s32.totalorder %s10, 3
    %p171 = pnand %p169, %p170
    %p172 = pneg %p171
    // Predicated region
    $region33: #{transformer_block.4} parent=5 // pred_check
      _
    $region34: #{transformer_block.4} parent=5 // pred_check_branch
      %174 = sbr.rel (%p171) target = $region36
    $region35: #{transformer_block.4} parent=5 // pred_region
      %s175 = ssub.s32 %s10, 1
      %p176 = scmp.lt.s32.totalorder %s15, 1
      %s177 = scalar_select %p176, %s15, 1
      %s178 = smul.addr %s177, 4
      %s179 = scalar_lea.vmem %s0, %s178
      %p180 = pneg %p36
      %p181 = pneg %p33
      %p182 = scmp.lt.s32.totalorder %s15, 1
      %s183 = scalar_select %p182, %s15, 1
      %s184 = smul.addr %s183, 8
      %s185 = scalar_lea.vmem %s1, %s184
      %p186 = pneg %p62
      %p187 = pneg %p59
      %p188 = pneg %p83
      %p189 = pneg %p80
      %p190 = pneg %p104
      %p191 = pneg %p101
      %p192 = pneg %p130
      %p193 = pneg %p127
      %p194 = scmp.lt.s32.totalorder %s15, 1
      %s195 = scalar_select %p194, %s15, 1
      %s196 = smul.addr %s195, 8
      %s197 = scalar_lea.vmem %s4, %s196
      %p198 = scmp.lt.s32.totalorder %s15, 1
      %s199 = scalar_select %p198, %s15, 1
      %s200 = smul.addr %s199, 4
      %s201 = scalar_lea.vmem %s0, %s200
      %p202 = scmp.lt.s32.totalorder %s15, 1
      %s203 = scalar_select %p202, %s15, 1
      %s204 = smul.addr %s203, 8
      %s205 = scalar_lea.vmem %s1, %s204
      %p206 = scmp.lt.s32.totalorder %s15, 1
      %s207 = scalar_select %p206, %s15, 1
      %s208 = smul.addr %s207, 8
      %s209 = scalar_lea.vmem %s4, %s208
      %v212 = vld [vmem:[%s201] sm:$0xf]
      %v213 = vmul.bf16 %v212, 1056980736
      %v215 = vunpack.c.l.b16 %v212
      %v216 = vpack.c.b16 %v215, %v215
      %217 = vrot.lane.b32.xlu0 %v216, 96
      %v218 = vpop.permute.xlu0 %217
      %vm219 = vcmask 31744
      %v221 = vsel %vm219, %v213, 0
      %v224 = vsel %vm219, %v218, 0
      %226 = vmatprep.subr.bf16.mxu0 0
      %227 = vmatpush1.bf16.xpose.msra.mxu0 0
      %228 = vmatprep.subr.bf16.mxu0 0
      %229 = vmatpush1.bf16.xpose.msra.mxu0 0
      %230 = vmatprep.subr.bf16.mxu0 0
      %231 = vmatpush1.bf16.xpose.msra.mxu0 0
      %232 = vmatprep.subr.bf16.mxu0 0
      %233 = vmatpush1.bf16.xpose.msra.mxu0 0
      %234 = vmatprep.subr.bf16.mxu0 0
      %235 = vmatpush1.bf16.xpose.msra.mxu0 0
      %236 = vmatprep.subr.bf16.mxu0 0
      %237 = vmatpush1.bf16.xpose.msra.mxu0 0
      %238 = vmatprep.subr.bf16.mxu0 0
      %239 = vmatpush1.bf16.xpose.msra.mxu0 0
      %240 = vmatprep.subr.bf16.mxu0 0
      %241 = vmatpush1.bf16.xpose.msra.mxu0 %v224
      %242 = vmatprep.subr.bf16.mxu0 0
      %243 = vmatpush2.bf16.xpose.msra.mxu0 0
      %244 = vmatprep.subr.bf16.mxu0 0
      %245 = vmatpush2.bf16.xpose.msra.mxu0 0
      %246 = vmatprep.subr.bf16.mxu0 0
      %247 = vmatpush2.bf16.xpose.msra.mxu0 0
      %248 = vmatprep.subr.bf16.mxu0 0
      %249 = vmatpush2.bf16.xpose.msra.mxu0 0
      %250 = vmatprep.subr.bf16.mxu0 0
      %251 = vmatpush2.bf16.xpose.msra.mxu0 0
      %252 = vmatprep.subr.bf16.mxu0 0
      %253 = vmatpush2.bf16.xpose.msra.mxu0 0
      %254 = vmatprep.subr.bf16.mxu0 0
      %255 = vmatpush2.bf16.xpose.msra.mxu0 0
      %256 = vmatprep.subr.bf16.mxu0 0
      %257 = vmatpush2.bf16.xpose.msra.mxu0 0
      %258 = vmatprep.mubr.bf16.mxu0 0
      %259 = vmatmul.mubr.bf16.gmra.mxu0 %v221
      %v260 = vpop.f32.mrf.mxu0
      %v261 = vadd.f32 0.0, %v260
      %v262 = vpop.f32.mrf.mxu0
      %v263 = vpop.f32.mrf.mxu0
      %v264 = vpop.f32.mrf.mxu0
      %265 = vdwg.mxu0
      %vm266 = vcmask 64512
      %v267 = vsel %vm266, %v261, -inf
      %268 = vmax.xlane.f32.xlu0 %v267
      %v269 = vpop.xlane.xlu0 %268
      %v270 = vsub.f32 %v261, %v269
      %v271 = vmul.f32 %v270, 1.442695
      %v272 = vpow.pop %v271
      %v273 = vsel %vm266, %v272, 0.0
      %274 = vadd.xlane.f32.xlu0 %v273
      %v275 = vpop.xlane.xlu0 %274
      %v276 = vrcp.pop %v275
      %v277 = vmul.f32 %v272, %v276
      %v278 = vpack.c.bf16 %v277, %v277
      %279 = vrot.lane.b32.xlu0 %v216, 64
      %v280 = vpop.permute.xlu0 %279
      %v282 = vsel %vm266, %v278, 0
      %vm284 = vcmask 1043456
      %v286 = vsel %vm284, %v280, 0
      %288 = vmatprep.subr.bf16.mxu0 0
      %289 = vmatpush1.bf16.msra.mxu0 0
      %290 = vmatprep.subr.bf16.mxu0 0
      %291 = vmatpush1.bf16.msra.mxu0 0
      %292 = vmatprep.subr.bf16.mxu0 0
      %293 = vmatpush1.bf16.msra.mxu0 0
      %294 = vmatprep.subr.bf16.mxu0 0
      %295 = vmatpush1.bf16.msra.mxu0 0
      %296 = vmatprep.subr.bf16.mxu0 0
      %297 = vmatpush1.bf16.msra.mxu0 0
      %298 = vmatprep.subr.bf16.mxu0 0
      %299 = vmatpush1.bf16.msra.mxu0 0
      %300 = vmatprep.subr.bf16.mxu0 0
      %301 = vmatpush1.bf16.msra.mxu0 0
      %302 = vmatprep.subr.bf16.mxu0 0
      %303 = vmatpush1.bf16.msra.mxu0 %v286
      %304 = vmatprep.subr.bf16.mxu0 0
      %305 = vmatpush2.bf16.msra.mxu0 0
      %306 = vmatprep.subr.bf16.mxu0 0
      %307 = vmatpush2.bf16.msra.mxu0 0
      %308 = vmatprep.subr.bf16.mxu0 0
      %309 = vmatpush2.bf16.msra.mxu0 0
      %310 = vmatprep.subr.bf16.mxu0 0
      %311 = vmatpush2.bf16.msra.mxu0 0
      %312 = vmatprep.subr.bf16.mxu0 0
      %313 = vmatpush2.bf16.msra.mxu0 0
      %314 = vmatprep.subr.bf16.mxu0 0
      %315 = vmatpush2.bf16.msra.mxu0 0
      %316 = vmatprep.subr.bf16.mxu0 0
      %317 = vmatpush2.bf16.msra.mxu0 0
      %318 = vmatprep.subr.bf16.mxu0 0
      %319 = vmatpush2.bf16.msra.mxu0 0
      %320 = vmatprep.mubr.bf16.mxu0 0
      %321 = vmatmul.mubr.bf16.gmra.mxu0 %v282
      %v322 = vpop.f32.mrf.mxu0
      %v323 = vadd.f32 0.0, %v322
      %v324 = vpop.f32.mrf.mxu0
      %v325 = vpop.f32.mrf.mxu0
      %v326 = vpop.f32.mrf.mxu0
      %327 = vdwg.mxu0
      %v329 = vunpack.c.l.b16 %v213
      %v330 = vpack.c.b16 %v329, %v329
      %331 = vrot.lane.b32.xlu0 %v330, 124
      %v332 = vpop.permute.xlu0 %331
      %333 = vrot.lane.b32.xlu0 %v216, 92
      %v334 = vpop.permute.xlu0 %333
      %v336 = vsel %vm219, %v332, 0
      %v339 = vsel %vm219, %v334, 0
      %341 = vmatprep.subr.bf16.mxu0 0
      %342 = vmatpush1.bf16.xpose.msra.mxu0 0
      %343 = vmatprep.subr.bf16.mxu0 0
      %344 = vmatpush1.bf16.xpose.msra.mxu0 0
      %345 = vmatprep.subr.bf16.mxu0 0
      %346 = vmatpush1.bf16.xpose.msra.mxu0 0
      %347 = vmatprep.subr.bf16.mxu0 0
      %348 = vmatpush1.bf16.xpose.msra.mxu0 0
      %349 = vmatprep.subr.bf16.mxu0 0
      %350 = vmatpush1.bf16.xpose.msra.mxu0 0
      %351 = vmatprep.subr.bf16.mxu0 0
      %352 = vmatpush1.bf16.xpose.msra.mxu0 0
      %353 = vmatprep.subr.bf16.mxu0 0
      %354 = vmatpush1.bf16.xpose.msra.mxu0 0
      %355 = vmatprep.subr.bf16.mxu0 0
      %356 = vmatpush1.bf16.xpose.msra.mxu0 %v339
      %357 = vmatprep.subr.bf16.mxu0 0
      %358 = vmatpush2.bf16.xpose.msra.mxu0 0
      %359 = vmatprep.subr.bf16.mxu0 0
      %360 = vmatpush2.bf16.xpose.msra.mxu0 0
      %361 = vmatprep.subr.bf16.mxu0 0
      %362 = vmatpush2.bf16.xpose.msra.mxu0 0
      %363 = vmatprep.subr.bf16.mxu0 0
      %364 = vmatpush2.bf16.xpose.msra.mxu0 0
      %365 = vmatprep.subr.bf16.mxu0 0
      %366 = vmatpush2.bf16.xpose.msra.mxu0 0
      %367 = vmatprep.subr.bf16.mxu0 0
      %368 = vmatpush2.bf16.xpose.msra.mxu0 0
      %369 = vmatprep.subr.bf16.mxu0 0
      %370 = vmatpush2.bf16.xpose.msra.mxu0 0
      %371 = vmatprep.subr.bf16.mxu0 0
      %372 = vmatpush2.bf16.xpose.msra.mxu0 0
      %373 = vmatprep.mubr.bf16.mxu0 0
      %374 = vmatmul.mubr.bf16.gmra.mxu0 %v336
      %v375 = vpop.f32.mrf.mxu0
      %v376 = vadd.f32 0.0, %v375
      %v377 = vpop.f32.mrf.mxu0
      %v378 = vpop.f32.mrf.mxu0
      %v379 = vpop.f32.mrf.mxu0
      %380 = vdwg.mxu0
      %v381 = vsel %vm266, %v376, -inf
      %382 = vmax.xlane.f32.xlu0 %v381
      %v383 = vpop.xlane.xlu0 %382
      %v384 = vsub.f32 %v376, %v383
      %v385 = vmul.f32 %v384, 1.442695
      %v386 = vpow.pop %v385
      %v387 = vsel %vm266, %v386, 0.0
      %388 = vadd.xlane.f32.xlu0 %v387
      %v389 = vpop.xlane.xlu0 %388
      %v390 = vrcp.pop %v389
      %v391 = vmul.f32 %v386, %v390
      %v392 = vpack.c.bf16 %v391, %v391
      %393 = vrot.lane.b32.xlu0 %v216, 60
      %v394 = vpop.permute.xlu0 %393
      %v396 = vsel %vm266, %v392, 0
      %v399 = vsel %vm284, %v394, 0
      %401 = vmatprep.subr.bf16.mxu0 0
      %402 = vmatpush1.bf16.msra.mxu0 0
      %403 = vmatprep.subr.bf16.mxu0 0
      %404 = vmatpush1.bf16.msra.mxu0 0
      %405 = vmatprep.subr.bf16.mxu0 0
      %406 = vmatpush1.bf16.msra.mxu0 0
      %407 = vmatprep.subr.bf16.mxu0 0
      %408 = vmatpush1.bf16.msra.mxu0 0
      %409 = vmatprep.subr.bf16.mxu0 0
      %410 = vmatpush1.bf16.msra.mxu0 0
      %411 = vmatprep.subr.bf16.mxu0 0
      %412 = vmatpush1.bf16.msra.mxu0 0
      %413 = vmatprep.subr.bf16.mxu0 0
      %414 = vmatpush1.bf16.msra.mxu0 0
      %415 = vmatprep.subr.bf16.mxu0 0
      %416 = vmatpush1.bf16.msra.mxu0 %v399
      %417 = vmatprep.subr.bf16.mxu0 0
      %418 = vmatpush2.bf16.msra.mxu0 0
      %419 = vmatprep.subr.bf16.mxu0 0
      %420 = vmatpush2.bf16.msra.mxu0 0
      %421 = vmatprep.subr.bf16.mxu0 0
      %422 = vmatpush2.bf16.msra.mxu0 0
      %423 = vmatprep.subr.bf16.mxu0 0
      %424 = vmatpush2.bf16.msra.mxu0 0
      %425 = vmatprep.subr.bf16.mxu0 0
      %426 = vmatpush2.bf16.msra.mxu0 0
      %427 = vmatprep.subr.bf16.mxu0 0
      %428 = vmatpush2.bf16.msra.mxu0 0
      %429 = vmatprep.subr.bf16.mxu0 0
      %430 = vmatpush2.bf16.msra.mxu0 0
      %431 = vmatprep.subr.bf16.mxu0 0
      %432 = vmatpush2.bf16.msra.mxu0 0
      %433 = vmatprep.mubr.bf16.mxu0 0
      %434 = vmatmul.mubr.bf16.gmra.mxu0 %v396
      %v435 = vpop.f32.mrf.mxu0
      %v436 = vadd.f32 0.0, %v435
      %v437 = vpop.f32.mrf.mxu0
      %v438 = vpop.f32.mrf.mxu0
      %v439 = vpop.f32.mrf.mxu0
      %440 = vdwg.mxu0
      %441 = vrot.lane.b32.xlu0 %v330, 120
      %v442 = vpop.permute.xlu0 %441
      %443 = vrot.lane.b32.xlu0 %v216, 88
      %v444 = vpop.permute.xlu0 %443
      %v446 = vsel %vm219, %v442, 0
      %v449 = vsel %vm219, %v444, 0
      %451 = vmatprep.subr.bf16.mxu0 0
      %452 = vmatpush1.bf16.xpose.msra.mxu0 0
      %453 = vmatprep.subr.bf16.mxu0 0
      %454 = vmatpush1.bf16.xpose.msra.mxu0 0
      %455 = vmatprep.subr.bf16.mxu0 0
      %456 = vmatpush1.bf16.xpose.msra.mxu0 0
      %457 = vmatprep.subr.bf16.mxu0 0
      %458 = vmatpush1.bf16.xpose.msra.mxu0 0
      %459 = vmatprep.subr.bf16.mxu0 0
      %460 = vmatpush1.bf16.xpose.msra.mxu0 0
      %461 = vmatprep.subr.bf16.mxu0 0
      %462 = vmatpush1.bf16.xpose.msra.mxu0 0
      %463 = vmatprep.subr.bf16.mxu0 0
      %464 = vmatpush1.bf16.xpose.msra.mxu0 0
      %465 = vmatprep.subr.bf16.mxu0 0
      %466 = vmatpush1.bf16.xpose.msra.mxu0 %v449
      %467 = vmatprep.subr.bf16.mxu0 0
      %468 = vmatpush2.bf16.xpose.msra.mxu0 0
      %469 = vmatprep.subr.bf16.mxu0 0
      %470 = vmatpush2.bf16.xpose.msra.mxu0 0
      %471 = vmatprep.subr.bf16.mxu0 0
      %472 = vmatpush2.bf16.xpose.msra.mxu0 0
      %473 = vmatprep.subr.bf16.mxu0 0
      %474 = vmatpush2.bf16.xpose.msra.mxu0 0
      %475 = vmatprep.subr.bf16.mxu0 0
      %476 = vmatpush2.bf16.xpose.msra.mxu0 0
      %477 = vmatprep.subr.bf16.mxu0 0
      %478 = vmatpush2.bf16.xpose.msra.mxu0 0
      %479 = vmatprep.subr.bf16.mxu0 0
      %480 = vmatpush2.bf16.xpose.msra.mxu0 0
      %481 = vmatprep.subr.bf16.mxu0 0
      %482 = vmatpush2.bf16.xpose.msra.mxu0 0
      %483 = vmatprep.mubr.bf16.mxu0 0
      %484 = vmatmul.mubr.bf16.gmra.mxu0 %v446
      %v485 = vpop.f32.mrf.mxu0
      %v486 = vadd.f32 0.0, %v485
      %v487 = vpop.f32.mrf.mxu0
      %v488 = vpop.f32.mrf.mxu0
      %v489 = vpop.f32.mrf.mxu0
      %490 = vdwg.mxu0
      %v491 = vsel %vm266, %v486, -inf
      %492 = vmax.xlane.f32.xlu0 %v491
      %v493 = vpop.xlane.xlu0 %492
      %v494 = vsub.f32 %v486, %v493
      %v495 = vmul.f32 %v494, 1.442695
      %v496 = vpow.pop %v495
      %v497 = vsel %vm266, %v496, 0.0
      %498 = vadd.xlane.f32.xlu0 %v497
      %v499 = vpop.xlane.xlu0 %498
      %v500 = vrcp.pop %v499
      %v501 = vmul.f32 %v496, %v500
      %v502 = vpack.c.bf16 %v501, %v501
      %503 = vrot.lane.b32.xlu0 %v216, 56
      %v504 = vpop.permute.xlu0 %503
      %v506 = vsel %vm266, %v502, 0
      %v509 = vsel %vm284, %v504, 0
      %511 = vmatprep.subr.bf16.mxu0 0
      %512 = vmatpush1.bf16.msra.mxu0 0
      %513 = vmatprep.subr.bf16.mxu0 0
      %514 = vmatpush1.bf16.msra.mxu0 0
      %515 = vmatprep.subr.bf16.mxu0 0
      %516 = vmatpush1.bf16.msra.mxu0 0
      %517 = vmatprep.subr.bf16.mxu0 0
      %518 = vmatpush1.bf16.msra.mxu0 0
      %519 = vmatprep.subr.bf16.mxu0 0
      %520 = vmatpush1.bf16.msra.mxu0 0
      %521 = vmatprep.subr.bf16.mxu0 0
      %522 = vmatpush1.bf16.msra.mxu0 0
      %523 = vmatprep.subr.bf16.mxu0 0
      %524 = vmatpush1.bf16.msra.mxu0 0
      %525 = vmatprep.subr.bf16.mxu0 0
      %526 = vmatpush1.bf16.msra.mxu0 %v509
      %527 = vmatprep.subr.bf16.mxu0 0
      %528 = vmatpush2.bf16.msra.mxu0 0
      %529 = vmatprep.subr.bf16.mxu0 0
      %530 = vmatpush2.bf16.msra.mxu0 0
      %531 = vmatprep.subr.bf16.mxu0 0
      %532 = vmatpush2.bf16.msra.mxu0 0
      %533 = vmatprep.subr.bf16.mxu0 0
      %534 = vmatpush2.bf16.msra.mxu0 0
      %535 = vmatprep.subr.bf16.mxu0 0
      %536 = vmatpush2.bf16.msra.mxu0 0
      %537 = vmatprep.subr.bf16.mxu0 0
      %538 = vmatpush2.bf16.msra.mxu0 0
      %539 = vmatprep.subr.bf16.mxu0 0
      %540 = vmatpush2.bf16.msra.mxu0 0
      %541 = vmatprep.subr.bf16.mxu0 0
      %542 = vmatpush2.bf16.msra.mxu0 0
      %543 = vmatprep.mubr.bf16.mxu0 0
      %544 = vmatmul.mubr.bf16.gmra.mxu0 %v506
      %v545 = vpop.f32.mrf.mxu0
      %v546 = vadd.f32 0.0, %v545
      %v547 = vpop.f32.mrf.mxu0
      %v548 = vpop.f32.mrf.mxu0
      %v549 = vpop.f32.mrf.mxu0
      %550 = vdwg.mxu0
      %551 = vrot.lane.b32.xlu0 %v330, 116
      %v552 = vpop.permute.xlu0 %551
      %553 = vrot.lane.b32.xlu0 %v216, 84
      %v554 = vpop.permute.xlu0 %553
      %v556 = vsel %vm219, %v552, 0
      %v559 = vsel %vm219, %v554, 0
      %561 = vmatprep.subr.bf16.mxu0 0
      %562 = vmatpush1.bf16.xpose.msra.mxu0 0
      %563 = vmatprep.subr.bf16.mxu0 0
      %564 = vmatpush1.bf16.xpose.msra.mxu0 0
      %565 = vmatprep.subr.bf16.mxu0 0
      %566 = vmatpush1.bf16.xpose.msra.mxu0 0
      %567 = vmatprep.subr.bf16.mxu0 0
      %568 = vmatpush1.bf16.xpose.msra.mxu0 0
      %569 = vmatprep.subr.bf16.mxu0 0
      %570 = vmatpush1.bf16.xpose.msra.mxu0 0
      %571 = vmatprep.subr.bf16.mxu0 0
      %572 = vmatpush1.bf16.xpose.msra.mxu0 0
      %573 = vmatprep.subr.bf16.mxu0 0
      %574 = vmatpush1.bf16.xpose.msra.mxu0 0
      %575 = vmatprep.subr.bf16.mxu0 0
      %576 = vmatpush1.bf16.xpose.msra.mxu0 %v559
      %577 = vmatprep.subr.bf16.mxu0 0
      %578 = vmatpush2.bf16.xpose.msra.mxu0 0
      %579 = vmatprep.subr.bf16.mxu0 0
      %580 = vmatpush2.bf16.xpose.msra.mxu0 0
      %581 = vmatprep.subr.bf16.mxu0 0
      %582 = vmatpush2.bf16.xpose.msra.mxu0 0
      %583 = vmatprep.subr.bf16.mxu0 0
      %584 = vmatpush2.bf16.xpose.msra.mxu0 0
      %585 = vmatprep.subr.bf16.mxu0 0
      %586 = vmatpush2.bf16.xpose.msra.mxu0 0
      %587 = vmatprep.subr.bf16.mxu0 0
      %588 = vmatpush2.bf16.xpose.msra.mxu0 0
      %589 = vmatprep.subr.bf16.mxu0 0
      %590 = vmatpush2.bf16.xpose.msra.mxu0 0
      %591 = vmatprep.subr.bf16.mxu0 0
      %592 = vmatpush2.bf16.xpose.msra.mxu0 0
      %593 = vmatprep.mubr.bf16.mxu0 0
      %594 = vmatmul.mubr.bf16.gmra.mxu0 %v556
      %v595 = vpop.f32.mrf.mxu0
      %v596 = vadd.f32 0.0, %v595
      %v597 = vpop.f32.mrf.mxu0
      %v598 = vpop.f32.mrf.mxu0
      %v599 = vpop.f32.mrf.mxu0
      %600 = vdwg.mxu0
      %v601 = vsel %vm266, %v596, -inf
      %602 = vmax.xlane.f32.xlu0 %v601
      %v603 = vpop.xlane.xlu0 %602
      %v604 = vsub.f32 %v596, %v603
      %v605 = vmul.f32 %v604, 1.442695
      %v606 = vpow.pop %v605
      %v607 = vsel %vm266, %v606, 0.0
      %608 = vadd.xlane.f32.xlu0 %v607
      %v609 = vpop.xlane.xlu0 %608
      %v610 = vrcp.pop %v609
      %v611 = vmul.f32 %v606, %v610
      %v612 = vpack.c.bf16 %v611, %v611
      %613 = vrot.lane.b32.xlu0 %v216, 52
      %v614 = vpop.permute.xlu0 %613
      %v616 = vsel %vm266, %v612, 0
      %v619 = vsel %vm284, %v614, 0
      %621 = vmatprep.subr.bf16.mxu0 0
      %622 = vmatpush1.bf16.msra.mxu0 0
      %623 = vmatprep.subr.bf16.mxu0 0
      %624 = vmatpush1.bf16.msra.mxu0 0
      %625 = vmatprep.subr.bf16.mxu0 0
      %626 = vmatpush1.bf16.msra.mxu0 0
      %627 = vmatprep.subr.bf16.mxu0 0
      %628 = vmatpush1.bf16.msra.mxu0 0
      %629 = vmatprep.subr.bf16.mxu0 0
      %630 = vmatpush1.bf16.msra.mxu0 0
      %631 = vmatprep.subr.bf16.mxu0 0
      %632 = vmatpush1.bf16.msra.mxu0 0
      %633 = vmatprep.subr.bf16.mxu0 0
      %634 = vmatpush1.bf16.msra.mxu0 0
      %635 = vmatprep.subr.bf16.mxu0 0
      %636 = vmatpush1.bf16.msra.mxu0 %v619
      %637 = vmatprep.subr.bf16.mxu0 0
      %638 = vmatpush2.bf16.msra.mxu0 0
      %639 = vmatprep.subr.bf16.mxu0 0
      %640 = vmatpush2.bf16.msra.mxu0 0
      %641 = vmatprep.subr.bf16.mxu0 0
      %642 = vmatpush2.bf16.msra.mxu0 0
      %643 = vmatprep.subr.bf16.mxu0 0
      %644 = vmatpush2.bf16.msra.mxu0 0
      %645 = vmatprep.subr.bf16.mxu0 0
      %646 = vmatpush2.bf16.msra.mxu0 0
      %647 = vmatprep.subr.bf16.mxu0 0
      %648 = vmatpush2.bf16.msra.mxu0 0
      %649 = vmatprep.subr.bf16.mxu0 0
      %650 = vmatpush2.bf16.msra.mxu0 0
      %651 = vmatprep.subr.bf16.mxu0 0
      %652 = vmatpush2.bf16.msra.mxu0 0
      %653 = vmatprep.mubr.bf16.mxu0 0
      %654 = vmatmul.mubr.bf16.gmra.mxu0 %v616
      %v655 = vpop.f32.mrf.mxu0
      %v656 = vadd.f32 0.0, %v655
      %v657 = vpop.f32.mrf.mxu0
      %v658 = vpop.f32.mrf.mxu0
      %v659 = vpop.f32.mrf.mxu0
      %660 = vdwg.mxu0
      %661 = vrot.lane.b32.xlu0 %v330, 112
      %v662 = vpop.permute.xlu0 %661
      %663 = vrot.lane.b32.xlu0 %v216, 80
      %v664 = vpop.permute.xlu0 %663
      %v666 = vsel %vm219, %v662, 0
      %v669 = vsel %vm219, %v664, 0
      %671 = vmatprep.subr.bf16.mxu0 0
      %672 = vmatpush1.bf16.xpose.msra.mxu0 0
      %673 = vmatprep.subr.bf16.mxu0 0
      %674 = vmatpush1.bf16.xpose.msra.mxu0 0
      %675 = vmatprep.subr.bf16.mxu0 0
      %676 = vmatpush1.bf16.xpose.msra.mxu0 0
      %677 = vmatprep.subr.bf16.mxu0 0
      %678 = vmatpush1.bf16.xpose.msra.mxu0 0
      %679 = vmatprep.subr.bf16.mxu0 0
      %680 = vmatpush1.bf16.xpose.msra.mxu0 0
      %681 = vmatprep.subr.bf16.mxu0 0
      %682 = vmatpush1.bf16.xpose.msra.mxu0 0
      %683 = vmatprep.subr.bf16.mxu0 0
      %684 = vmatpush1.bf16.xpose.msra.mxu0 0
      %685 = vmatprep.subr.bf16.mxu0 0
      %686 = vmatpush1.bf16.xpose.msra.mxu0 %v669
      %687 = vmatprep.subr.bf16.mxu0 0
      %688 = vmatpush2.bf16.xpose.msra.mxu0 0
      %689 = vmatprep.subr.bf16.mxu0 0
      %690 = vmatpush2.bf16.xpose.msra.mxu0 0
      %691 = vmatprep.subr.bf16.mxu0 0
      %692 = vmatpush2.bf16.xpose.msra.mxu0 0
      %693 = vmatprep.subr.bf16.mxu0 0
      %694 = vmatpush2.bf16.xpose.msra.mxu0 0
      %695 = vmatprep.subr.bf16.mxu0 0
      %696 = vmatpush2.bf16.xpose.msra.mxu0 0
      %697 = vmatprep.subr.bf16.mxu0 0
      %698 = vmatpush2.bf16.xpose.msra.mxu0 0
      %699 = vmatprep.subr.bf16.mxu0 0
      %700 = vmatpush2.bf16.xpose.msra.mxu0 0
      %701 = vmatprep.subr.bf16.mxu0 0
      %702 = vmatpush2.bf16.xpose.msra.mxu0 0
      %703 = vmatprep.mubr.bf16.mxu0 0
      %704 = vmatmul.mubr.bf16.gmra.mxu0 %v666
      %v705 = vpop.f32.mrf.mxu0
      %v706 = vadd.f32 0.0, %v705
      %v707 = vpop.f32.mrf.mxu0
      %v708 = vpop.f32.mrf.mxu0
      %v709 = vpop.f32.mrf.mxu0
      %710 = vdwg.mxu0
      %v711 = vsel %vm266, %v706, -inf
      %712 = vmax.xlane.f32.xlu0 %v711
      %v713 = vpop.xlane.xlu0 %712
      %v714 = vsub.f32 %v706, %v713
      %v715 = vmul.f32 %v714, 1.442695
      %v716 = vpow.pop %v715
      %v717 = vsel %vm266, %v716, 0.0
      %718 = vadd.xlane.f32.xlu0 %v717
      %v719 = vpop.xlane.xlu0 %718
      %v720 = vrcp.pop %v719
      %v721 = vmul.f32 %v716, %v720
      %v722 = vpack.c.bf16 %v721, %v721
      %723 = vrot.lane.b32.xlu0 %v216, 48
      %v724 = vpop.permute.xlu0 %723
      %v726 = vsel %vm266, %v722, 0
      %v729 = vsel %vm284, %v724, 0
      %731 = vmatprep.subr.bf16.mxu0 0
      %732 = vmatpush1.bf16.msra.mxu0 0
      %733 = vmatprep.subr.bf16.mxu0 0
      %734 = vmatpush1.bf16.msra.mxu0 0
      %735 = vmatprep.subr.bf16.mxu0 0
      %736 = vmatpush1.bf16.msra.mxu0 0
      %737 = vmatprep.subr.bf16.mxu0 0
      %738 = vmatpush1.bf16.msra.mxu0 0
      %739 = vmatprep.subr.bf16.mxu0 0
      %740 = vmatpush1.bf16.msra.mxu0 0
      %741 = vmatprep.subr.bf16.mxu0 0
      %742 = vmatpush1.bf16.msra.mxu0 0
      %743 = vmatprep.subr.bf16.mxu0 0
      %744 = vmatpush1.bf16.msra.mxu0 0
      %745 = vmatprep.subr.bf16.mxu0 0
      %746 = vmatpush1.bf16.msra.mxu0 %v729
      %747 = vmatprep.subr.bf16.mxu0 0
      %748 = vmatpush2.bf16.msra.mxu0 0
      %749 = vmatprep.subr.bf16.mxu0 0
      %750 = vmatpush2.bf16.msra.mxu0 0
      %751 = vmatprep.subr.bf16.mxu0 0
      %752 = vmatpush2.bf16.msra.mxu0 0
      %753 = vmatprep.subr.bf16.mxu0 0
      %754 = vmatpush2.bf16.msra.mxu0 0
      %755 = vmatprep.subr.bf16.mxu0 0
      %756 = vmatpush2.bf16.msra.mxu0 0
      %757 = vmatprep.subr.bf16.mxu0 0
      %758 = vmatpush2.bf16.msra.mxu0 0
      %759 = vmatprep.subr.bf16.mxu0 0
      %760 = vmatpush2.bf16.msra.mxu0 0
      %761 = vmatprep.subr.bf16.mxu0 0
      %762 = vmatpush2.bf16.msra.mxu0 0
      %763 = vmatprep.mubr.bf16.mxu0 0
      %764 = vmatmul.mubr.bf16.gmra.mxu0 %v726
      %v765 = vpop.f32.mrf.mxu0
      %v766 = vadd.f32 0.0, %v765
      %v767 = vpop.f32.mrf.mxu0
      %v768 = vpop.f32.mrf.mxu0
      %v769 = vpop.f32.mrf.mxu0
      %770 = vdwg.mxu0
      %771 = vrot.lane.b32.xlu0 %v330, 108
      %v772 = vpop.permute.xlu0 %771
      %773 = vrot.lane.b32.xlu0 %v216, 76
      %v774 = vpop.permute.xlu0 %773
      %v776 = vsel %vm219, %v772, 0
      %v779 = vsel %vm219, %v774, 0
      %781 = vmatprep.subr.bf16.mxu0 0
      %782 = vmatpush1.bf16.xpose.msra.mxu0 0
      %783 = vmatprep.subr.bf16.mxu0 0
      %784 = vmatpush1.bf16.xpose.msra.mxu0 0
      %785 = vmatprep.subr.bf16.mxu0 0
      %786 = vmatpush1.bf16.xpose.msra.mxu0 0
      %787 = vmatprep.subr.bf16.mxu0 0
      %788 = vmatpush1.bf16.xpose.msra.mxu0 0
      %789 = vmatprep.subr.bf16.mxu0 0
      %790 = vmatpush1.bf16.xpose.msra.mxu0 0
      %791 = vmatprep.subr.bf16.mxu0 0
      %792 = vmatpush1.bf16.xpose.msra.mxu0 0
      %793 = vmatprep.subr.bf16.mxu0 0
      %794 = vmatpush1.bf16.xpose.msra.mxu0 0
      %795 = vmatprep.subr.bf16.mxu0 0
      %796 = vmatpush1.bf16.xpose.msra.mxu0 %v779
      %797 = vmatprep.subr.bf16.mxu0 0
      %798 = vmatpush2.bf16.xpose.msra.mxu0 0
      %799 = vmatprep.subr.bf16.mxu0 0
      %800 = vmatpush2.bf16.xpose.msra.mxu0 0
      %801 = vmatprep.subr.bf16.mxu0 0
      %802 = vmatpush2.bf16.xpose.msra.mxu0 0
      %803 = vmatprep.subr.bf16.mxu0 0
      %804 = vmatpush2.bf16.xpose.msra.mxu0 0
      %805 = vmatprep.subr.bf16.mxu0 0
      %806 = vmatpush2.bf16.xpose.msra.mxu0 0
      %807 = vmatprep.subr.bf16.mxu0 0
      %808 = vmatpush2.bf16.xpose.msra.mxu0 0
      %809 = vmatprep.subr.bf16.mxu0 0
      %810 = vmatpush2.bf16.xpose.msra.mxu0 0
      %811 = vmatprep.subr.bf16.mxu0 0
      %812 = vmatpush2.bf16.xpose.msra.mxu0 0
      %813 = vmatprep.mubr.bf16.mxu0 0
      %814 = vmatmul.mubr.bf16.gmra.mxu0 %v776
      %v815 = vpop.f32.mrf.mxu0
      %v816 = vadd.f32 0.0, %v815
      %v817 = vpop.f32.mrf.mxu0
      %v818 = vpop.f32.mrf.mxu0
      %v819 = vpop.f32.mrf.mxu0
      %820 = vdwg.mxu0
      %v821 = vsel %vm266, %v816, -inf
      %822 = vmax.xlane.f32.xlu0 %v821
      %v823 = vpop.xlane.xlu0 %822
      %v824 = vsub.f32 %v816, %v823
      %v825 = vmul.f32 %v824, 1.442695
      %v826 = vpow.pop %v825
      %v827 = vsel %vm266, %v826, 0.0
      %828 = vadd.xlane.f32.xlu0 %v827
      %v829 = vpop.xlane.xlu0 %828
      %v830 = vrcp.pop %v829
      %v831 = vmul.f32 %v826, %v830
      %v832 = vpack.c.bf16 %v831, %v831
      %833 = vrot.lane.b32.xlu0 %v216, 44
      %v834 = vpop.permute.xlu0 %833
      %v836 = vsel %vm266, %v832, 0
      %v839 = vsel %vm284, %v834, 0
      %841 = vmatprep.subr.bf16.mxu0 0
      %842 = vmatpush1.bf16.msra.mxu0 0
      %843 = vmatprep.subr.bf16.mxu0 0
      %844 = vmatpush1.bf16.msra.mxu0 0
      %845 = vmatprep.subr.bf16.mxu0 0
      %846 = vmatpush1.bf16.msra.mxu0 0
      %847 = vmatprep.subr.bf16.mxu0 0
      %848 = vmatpush1.bf16.msra.mxu0 0
      %849 = vmatprep.subr.bf16.mxu0 0
      %850 = vmatpush1.bf16.msra.mxu0 0
      %851 = vmatprep.subr.bf16.mxu0 0
      %852 = vmatpush1.bf16.msra.mxu0 0
      %853 = vmatprep.subr.bf16.mxu0 0
      %854 = vmatpush1.bf16.msra.mxu0 0
      %855 = vmatprep.subr.bf16.mxu0 0
      %856 = vmatpush1.bf16.msra.mxu0 %v839
      %857 = vmatprep.subr.bf16.mxu0 0
      %858 = vmatpush2.bf16.msra.mxu0 0
      %859 = vmatprep.subr.bf16.mxu0 0
      %860 = vmatpush2.bf16.msra.mxu0 0
      %861 = vmatprep.subr.bf16.mxu0 0
      %862 = vmatpush2.bf16.msra.mxu0 0
      %863 = vmatprep.subr.bf16.mxu0 0
      %864 = vmatpush2.bf16.msra.mxu0 0
      %865 = vmatprep.subr.bf16.mxu0 0
      %866 = vmatpush2.bf16.msra.mxu0 0
      %867 = vmatprep.subr.bf16.mxu0 0
      %868 = vmatpush2.bf16.msra.mxu0 0
      %869 = vmatprep.subr.bf16.mxu0 0
      %870 = vmatpush2.bf16.msra.mxu0 0
      %871 = vmatprep.subr.bf16.mxu0 0
      %872 = vmatpush2.bf16.msra.mxu0 0
      %873 = vmatprep.mubr.bf16.mxu0 0
      %874 = vmatmul.mubr.bf16.gmra.mxu0 %v836
      %v875 = vpop.f32.mrf.mxu0
      %v876 = vadd.f32 0.0, %v875
      %v877 = vpop.f32.mrf.mxu0
      %v878 = vpop.f32.mrf.mxu0
      %v879 = vpop.f32.mrf.mxu0
      %880 = vdwg.mxu0
      %881 = vrot.lane.b32.xlu0 %v330, 104
      %v882 = vpop.permute.xlu0 %881
      %883 = vrot.lane.b32.xlu0 %v216, 72
      %v884 = vpop.permute.xlu0 %883
      %v886 = vsel %vm219, %v882, 0
      %v889 = vsel %vm219, %v884, 0
      %891 = vmatprep.subr.bf16.mxu0 0
      %892 = vmatpush1.bf16.xpose.msra.mxu0 0
      %893 = vmatprep.subr.bf16.mxu0 0
      %894 = vmatpush1.bf16.xpose.msra.mxu0 0
      %895 = vmatprep.subr.bf16.mxu0 0
      %896 = vmatpush1.bf16.xpose.msra.mxu0 0
      %897 = vmatprep.subr.bf16.mxu0 0
      %898 = vmatpush1.bf16.xpose.msra.mxu0 0
      %899 = vmatprep.subr.bf16.mxu0 0
      %900 = vmatpush1.bf16.xpose.msra.mxu0 0
      %901 = vmatprep.subr.bf16.mxu0 0
      %902 = vmatpush1.bf16.xpose.msra.mxu0 0
      %903 = vmatprep.subr.bf16.mxu0 0
      %904 = vmatpush1.bf16.xpose.msra.mxu0 0
      %905 = vmatprep.subr.bf16.mxu0 0
      %906 = vmatpush1.bf16.xpose.msra.mxu0 %v889
      %907 = vmatprep.subr.bf16.mxu0 0
      %908 = vmatpush2.bf16.xpose.msra.mxu0 0
      %909 = vmatprep.subr.bf16.mxu0 0
      %910 = vmatpush2.bf16.xpose.msra.mxu0 0
      %911 = vmatprep.subr.bf16.mxu0 0
      %912 = vmatpush2.bf16.xpose.msra.mxu0 0
      %913 = vmatprep.subr.bf16.mxu0 0
      %914 = vmatpush2.bf16.xpose.msra.mxu0 0
      %915 = vmatprep.subr.bf16.mxu0 0
      %916 = vmatpush2.bf16.xpose.msra.mxu0 0
      %917 = vmatprep.subr.bf16.mxu0 0
      %918 = vmatpush2.bf16.xpose.msra.mxu0 0
      %919 = vmatprep.subr.bf16.mxu0 0
      %920 = vmatpush2.bf16.xpose.msra.mxu0 0
      %921 = vmatprep.subr.bf16.mxu0 0
      %922 = vmatpush2.bf16.xpose.msra.mxu0 0
      %923 = vmatprep.mubr.bf16.mxu0 0
      %924 = vmatmul.mubr.bf16.gmra.mxu0 %v886
      %v925 = vpop.f32.mrf.mxu0
      %v926 = vadd.f32 0.0, %v925
      %v927 = vpop.f32.mrf.mxu0
      %v928 = vpop.f32.mrf.mxu0
      %v929 = vpop.f32.mrf.mxu0
      %930 = vdwg.mxu0
      %v931 = vsel %vm266, %v926, -inf
      %932 = vmax.xlane.f32.xlu0 %v931
      %v933 = vpop.xlane.xlu0 %932
      %v934 = vsub.f32 %v926, %v933
      %v935 = vmul.f32 %v934, 1.442695
      %v936 = vpow.pop %v935
      %v937 = vsel %vm266, %v936, 0.0
      %938 = vadd.xlane.f32.xlu0 %v937
      %v939 = vpop.xlane.xlu0 %938
      %v940 = vrcp.pop %v939
      %v941 = vmul.f32 %v936, %v940
      %v942 = vpack.c.bf16 %v941, %v941
      %943 = vrot.lane.b32.xlu0 %v216, 40
      %v944 = vpop.permute.xlu0 %943
      %v946 = vsel %vm266, %v942, 0
      %v949 = vsel %vm284, %v944, 0
      %951 = vmatprep.subr.bf16.mxu0 0
      %952 = vmatpush1.bf16.msra.mxu0 0
      %953 = vmatprep.subr.bf16.mxu0 0
      %954 = vmatpush1.bf16.msra.mxu0 0
      %955 = vmatprep.subr.bf16.mxu0 0
      %956 = vmatpush1.bf16.msra.mxu0 0
      %957 = vmatprep.subr.bf16.mxu0 0
      %958 = vmatpush1.bf16.msra.mxu0 0
      %959 = vmatprep.subr.bf16.mxu0 0
      %960 = vmatpush1.bf16.msra.mxu0 0
      %961 = vmatprep.subr.bf16.mxu0 0
      %962 = vmatpush1.bf16.msra.mxu0 0
      %963 = vmatprep.subr.bf16.mxu0 0
      %964 = vmatpush1.bf16.msra.mxu0 0
      %965 = vmatprep.subr.bf16.mxu0 0
      %966 = vmatpush1.bf16.msra.mxu0 %v949
      %967 = vmatprep.subr.bf16.mxu0 0
      %968 = vmatpush2.bf16.msra.mxu0 0
      %969 = vmatprep.subr.bf16.mxu0 0
      %970 = vmatpush2.bf16.msra.mxu0 0
      %971 = vmatprep.subr.bf16.mxu0 0
      %972 = vmatpush2.bf16.msra.mxu0 0
      %973 = vmatprep.subr.bf16.mxu0 0
      %974 = vmatpush2.bf16.msra.mxu0 0
      %975 = vmatprep.subr.bf16.mxu0 0
      %976 = vmatpush2.bf16.msra.mxu0 0
      %977 = vmatprep.subr.bf16.mxu0 0
      %978 = vmatpush2.bf16.msra.mxu0 0
      %979 = vmatprep.subr.bf16.mxu0 0
      %980 = vmatpush2.bf16.msra.mxu0 0
      %981 = vmatprep.subr.bf16.mxu0 0
      %982 = vmatpush2.bf16.msra.mxu0 0
      %983 = vmatprep.mubr.bf16.mxu0 0
      %984 = vmatmul.mubr.bf16.gmra.mxu0 %v946
      %v985 = vpop.f32.mrf.mxu0
      %v986 = vadd.f32 0.0, %v985
      %v987 = vpop.f32.mrf.mxu0
      %v988 = vpop.f32.mrf.mxu0
      %v989 = vpop.f32.mrf.mxu0
      %990 = vdwg.mxu0
      %991 = vrot.lane.b32.xlu0 %v330, 100
      %v992 = vpop.permute.xlu0 %991
      %993 = vrot.lane.b32.xlu0 %v216, 68
      %v994 = vpop.permute.xlu0 %993
      %v996 = vsel %vm219, %v992, 0
      %v999 = vsel %vm219, %v994, 0
      %1001 = vmatprep.subr.bf16.mxu0 0
      %1002 = vmatpush1.bf16.xpose.msra.mxu0 0
      %1003 = vmatprep.subr.bf16.mxu0 0
      %1004 = vmatpush1.bf16.xpose.msra.mxu0 0
      %1005 = vmatprep.subr.bf16.mxu0 0
      %1006 = vmatpush1.bf16.xpose.msra.mxu0 0
      %1007 = vmatprep.subr.bf16.mxu0 0
      %1008 = vmatpush1.bf16.xpose.msra.mxu0 0
      %1009 = vmatprep.subr.bf16.mxu0 0
      %1010 = vmatpush1.bf16.xpose.msra.mxu0 0
      %1011 = vmatprep.subr.bf16.mxu0 0
      %1012 = vmatpush1.bf16.xpose.msra.mxu0 0
      %1013 = vmatprep.subr.bf16.mxu0 0
      %1014 = vmatpush1.bf16.xpose.msra.mxu0 0
      %1015 = vmatprep.subr.bf16.mxu0 0
      %1016 = vmatpush1.bf16.xpose.msra.mxu0 %v999
      %1017 = vmatprep.subr.bf16.mxu0 0
      %1018 = vmatpush2.bf16.xpose.msra.mxu0 0
      %1019 = vmatprep.subr.bf16.mxu0 0
      %1020 = vmatpush2.bf16.xpose.msra.mxu0 0
      %1021 = vmatprep.subr.bf16.mxu0 0
      %1022 = vmatpush2.bf16.xpose.msra.mxu0 0
      %1023 = vmatprep.subr.bf16.mxu0 0
      %1024 = vmatpush2.bf16.xpose.msra.mxu0 0
      %1025 = vmatprep.subr.bf16.mxu0 0
      %1026 = vmatpush2.bf16.xpose.msra.mxu0 0
      %1027 = vmatprep.subr.bf16.mxu0 0
      %1028 = vmatpush2.bf16.xpose.msra.mxu0 0
      %1029 = vmatprep.subr.bf16.mxu0 0
      %1030 = vmatpush2.bf16.xpose.msra.mxu0 0
      %1031 = vmatprep.subr.bf16.mxu0 0
      %1032 = vmatpush2.bf16.xpose.msra.mxu0 0
      %1033 = vmatprep.mubr.bf16.mxu0 0
      %1034 = vmatmul.mubr.bf16.gmra.mxu0 %v996
      %v1035 = vpop.f32.mrf.mxu0
      %v1036 = vadd.f32 0.0, %v1035
      %v1037 = vpop.f32.mrf.mxu0
      %v1038 = vpop.f32.mrf.mxu0
      %v1039 = vpop.f32.mrf.mxu0
      %1040 = vdwg.mxu0
      %v1041 = vsel %vm266, %v1036, -inf
      %1042 = vmax.xlane.f32.xlu0 %v1041
      %v1043 = vpop.xlane.xlu0 %1042
      %v1044 = vsub.f32 %v1036, %v1043
      %v1045 = vmul.f32 %v1044, 1.442695
      %v1046 = vpow.pop %v1045
      %v1047 = vsel %vm266, %v1046, 0.0
      %1048 = vadd.xlane.f32.xlu0 %v1047
      %v1049 = vpop.xlane.xlu0 %1048
      %v1050 = vrcp.pop %v1049
      %v1051 = vmul.f32 %v1046, %v1050
      %v1052 = vpack.c.bf16 %v1051, %v1051
      %1053 = vrot.lane.b32.xlu0 %v216, 36
      %v1054 = vpop.permute.xlu0 %1053
      %v1056 = vsel %vm266, %v1052, 0
      %v1059 = vsel %vm284, %v1054, 0
      %1061 = vmatprep.subr.bf16.mxu0 0
      %1062 = vmatpush1.bf16.msra.mxu0 0
      %1063 = vmatprep.subr.bf16.mxu0 0
      %1064 = vmatpush1.bf16.msra.mxu0 0
      %1065 = vmatprep.subr.bf16.mxu0 0
      %1066 = vmatpush1.bf16.msra.mxu0 0
      %1067 = vmatprep.subr.bf16.mxu0 0
      %1068 = vmatpush1.bf16.msra.mxu0 0
      %1069 = vmatprep.subr.bf16.mxu0 0
      %1070 = vmatpush1.bf16.msra.mxu0 0
      %1071 = vmatprep.subr.bf16.mxu0 0
      %1072 = vmatpush1.bf16.msra.mxu0 0
      %1073 = vmatprep.subr.bf16.mxu0 0
      %1074 = vmatpush1.bf16.msra.mxu0 0
      %1075 = vmatprep.subr.bf16.mxu0 0
      %1076 = vmatpush1.bf16.msra.mxu0 %v1059
      %1077 = vmatprep.subr.bf16.mxu0 0
      %1078 = vmatpush2.bf16.msra.mxu0 0
      %1079 = vmatprep.subr.bf16.mxu0 0
      %1080 = vmatpush2.bf16.msra.mxu0 0
      %1081 = vmatprep.subr.bf16.mxu0 0
      %1082 = vmatpush2.bf16.msra.mxu0 0
      %1083 = vmatprep.subr.bf16.mxu0 0
      %1084 = vmatpush2.bf16.msra.mxu0 0
      %1085 = vmatprep.subr.bf16.mxu0 0
      %1086 = vmatpush2.bf16.msra.mxu0 0
      %1087 = vmatprep.subr.bf16.mxu0 0
      %1088 = vmatpush2.bf16.msra.mxu0 0
      %1089 = vmatprep.subr.bf16.mxu0 0
      %1090 = vmatpush2.bf16.msra.mxu0 0
      %1091 = vmatprep.subr.bf16.mxu0 0
      %1092 = vmatpush2.bf16.msra.mxu0 0
      %1093 = vmatprep.mubr.bf16.mxu0 0
      %1094 = vmatmul.mubr.bf16.gmra.mxu0 %v1056
      %v1095 = vpop.f32.mrf.mxu0
      %v1096 = vadd.f32 0.0, %v1095
      %v1097 = vpop.f32.mrf.mxu0
      %v1098 = vpop.f32.mrf.mxu0
      %v1099 = vpop.f32.mrf.mxu0
      %1100 = vdwg.mxu0
      %1102 = vrot.lane.b32.xlu0 %v436, 4
      %v1103 = vpop.permute.xlu0 %1102
      %1106 = vrot.lane.b32.xlu0 %v546, 8
      %v1107 = vpop.permute.xlu0 %1106
      %1110 = vrot.lane.b32.xlu0 %v656, 12
      %v1111 = vpop.permute.xlu0 %1110
      %1114 = vrot.lane.b32.xlu0 %v766, 16
      %v1115 = vpop.permute.xlu0 %1114
      %1118 = vrot.lane.b32.xlu0 %v876, 20
      %v1119 = vpop.permute.xlu0 %1118
      %1122 = vrot.lane.b32.xlu0 %v986, 24
      %v1123 = vpop.permute.xlu0 %1122
      %1126 = vrot.lane.b32.xlu0 %v1096, 28
      %v1127 = vpop.permute.xlu0 %1126
      %v1129 = vsel %vm219, %v323, %v1103
      %v1130 = vsel %vm266, %v1129, %v1107
      %vm1131 = vcmask 97280
      %v1132 = vsel %vm1131, %v1130, %v1111
      %vm1133 = vcmask 130048
      %v1134 = vsel %vm1133, %v1132, %v1115
      %vm1135 = vcmask 162816
      %v1136 = vsel %vm1135, %v1134, %v1119
      %vm1137 = vcmask 195584
      %v1138 = vsel %vm1137, %v1136, %v1123
      %vm1139 = vcmask 228352
      %v1140 = vsel %vm1139, %v1138, %v1127
      %v1141 = vpack.c.bf16 %v1140, %v1140
      %v1142 = vld [vmem:[%s2] sm:$0xf]
      %v1143 = vld [vmem:[%s2 + $0x4] sm:$0xf]
      %v1144 = vld [vmem:[%s2 + $0x8] sm:$0xf]
      %v1145 = vld [vmem:[%s2 + $0xc] sm:$0xf]
      %v1150 = vunpack.c.l.b16 %v1142
      %v1151 = vunpack.c.l.b16 %v1143
      %v1152 = vunpack.c.l.b16 %v1144
      %v1153 = vunpack.c.l.b16 %v1145
      %v1154 = vpack.c.b16 %v1151, %v1150
      %v1155 = vpack.c.b16 %v1153, %v1152
      %vm1158 = vcmask 261120
      %v1160 = vsel %vm1158, %v1141, 0
      %1162 = vmatprep.subr.bf16.mxu0 0
      %1163 = vmatpush1.bf16.msra.mxu0 0
      %1164 = vmatprep.subr.bf16.mxu0 0
      %1165 = vmatpush1.bf16.msra.mxu0 0
      %1166 = vmatprep.subr.bf16.mxu0 0
      %1167 = vmatpush1.bf16.msra.mxu0 0
      %1168 = vmatprep.subr.bf16.mxu0 0
      %1169 = vmatpush1.bf16.msra.mxu0 0
      %1170 = vmatprep.subr.bf16.mxu0 0
      %1171 = vmatpush1.bf16.msra.mxu0 0
      %1172 = vmatprep.subr.bf16.mxu0 0
      %1173 = vmatpush1.bf16.msra.mxu0 0
      %1174 = vmatprep.subr.bf16.mxu0 0
      %1175 = vmatpush1.bf16.msra.mxu0 %v1155
      %1176 = vmatprep.subr.bf16.mxu0 0
      %1177 = vmatpush1.bf16.msra.mxu0 %v1154
      %1178 = vmatprep.subr.bf16.mxu0 0
      %1179 = vmatpush2.bf16.msra.mxu0 0
      %1180 = vmatprep.subr.bf16.mxu0 0
      %1181 = vmatpush2.bf16.msra.mxu0 0
      %1182 = vmatprep.subr.bf16.mxu0 0
      %1183 = vmatpush2.bf16.msra.mxu0 0
      %1184 = vmatprep.subr.bf16.mxu0 0
      %1185 = vmatpush2.bf16.msra.mxu0 0
      %1186 = vmatprep.subr.bf16.mxu0 0
      %1187 = vmatpush2.bf16.msra.mxu0 0
      %1188 = vmatprep.subr.bf16.mxu0 0
      %1189 = vmatpush2.bf16.msra.mxu0 0
      %1190 = vmatprep.subr.bf16.mxu0 0
      %1191 = vmatpush2.bf16.msra.mxu0 0
      %1192 = vmatprep.subr.bf16.mxu0 0
      %1193 = vmatpush2.bf16.msra.mxu0 0
      %1194 = vmatprep.mubr.bf16.mxu0 0
      %1195 = vmatmul.mubr.bf16.gmra.mxu0 %v1160
      %v1196 = vpop.f32.mrf.mxu0
      %v1197 = vadd.f32 0.0, %v1196
      %v1198 = vpop.f32.mrf.mxu0
      %v1199 = vpop.f32.mrf.mxu0
      %v1200 = vpop.f32.mrf.mxu0
      %1201 = vdwg.mxu0
      %v1202 = vld [vmem:[%s205] sm:$0xff]
      %v1203 = vadd.f32 %v1202, %v1197
      %v1204 = vld [vmem:[%s3] sm:$0x1]
      %v1206 = vlaneseq
      %v1207 = vshrl.u32 %v1206, 7
      %v1208 = vsub.s32 0, %v1207
      %v1209 = vrot.slane %v1204, %v1208
      %v1211 = vadd.f32 %v1203, %v1209
      %1212 = vst.msk [vmem:[%s209] sm:$0xff] %vm1158, %v1211
      %p1213 = scmp.lt.s32.totalorder %s15, 1
      %s1214 = scalar_select %p1213, %s15, 1
      %s1215 = smul.addr %s1214, 8
      %s1216 = scalar_lea.vmem %s4, %s1215
      // Predicated region
      $region37: #{transformer_block.4} parent=35 // pred_check
        %p1217 = pneg %p127
      $region38: #{transformer_block.4} parent=35 // pred_check_branch
        %1219 = sbr.rel (%p1217) target = $region40
      $region39: #{transformer_block.4} parent=35 // pred_region
        _
      $region40: #{transformer_block.4} parent=35 // pred_fallthru
        _
    $region36: #{transformer_block.4} parent=5 // pred_fallthru
      _
    %p1220 = scmp.le.s32.totalorder 2, %s10
    // Predicated region
    $region41: #{transformer_block.4} parent=5 // pred_check
      %p1221 = pneg %p1220
    $region42: #{transformer_block.4} parent=5 // pred_check_branch
      %1223 = sbr.rel (%p1221) target = $region44
    $region43: #{transformer_block.4} parent=5 // pred_region
      %s1224 = ssub.s32 %s10, 2
      // Predicated region
      $region45: #{transformer_block.4} parent=43 // pred_check
        %p1225 = pneg %p133
      $region46: #{transformer_block.4} parent=43 // pred_check_branch
        %1227 = sbr.rel (%p1225) target = $region48
      $region47: #{transformer_block.4} parent=43 // pred_region
        %p1228 = scmp.lt.s32.totalorder %s16, 1
        %s1229 = scalar_select %p1228, %s16, 1
        %s1230 = smul.addr %s1229, 8
        %s1231 = scalar_lea.vmem %s4, %s1230
      $region48: #{transformer_block.4} parent=43 // pred_fallthru
        _
    $region44: #{transformer_block.4} parent=5 // pred_fallthru
      _
  $region6: #{transformer_block.4} parent=0 // loop_footer
    %s14 = sadd.s32 1, %s10
  $region7: #{transformer_block.4} parent=0 // loop_footer_branch
    %9 = sbr.rel target = $region3
  $region8: #{transformer_block.4} parent=0 // loop_exit
    _

</llo_original>
